<compile_context>
chip_gen: v7x
topology: tpu7x:2x2x1
jax: 0.10.0
libtpu: 0.0.40
codegen_flags: <defaults>
</compile_context>

<pallas_src>
import functools

import jax
import jax.numpy as jnp
from jax import lax
from jax.experimental import pallas as pl
from jax.experimental.pallas import tpu as pltpu


# ----------------------------------------------------------------------------
# Kernel 1: 3x3 conv (+ bias) as 9 shifted bf16 matmuls with f32 accumulation
#           -> skip, plus per-channel sums of relu(skip) for the BN statistics,
#           accumulated across the batch grid into resident output blocks.
# Layout: channels in sublanes, flattened padded spatial axis in lanes.
# ----------------------------------------------------------------------------
def conv3x3_stats_kernel(x_ref, w_ref, b_ref, mask_ref,
                         skip_ref, psum_ref, pssq_ref, *, wp):
    @pl.when(pl.program_id(0) == 0)
    def _():
        psum_ref[...] = jnp.zeros_like(psum_ref)
        pssq_ref[...] = jnp.zeros_like(pssq_ref)

    cout = skip_ref.shape[1]
    m = skip_ref.shape[2]

    x = x_ref[0]                                   # (Cin, L) bf16, whole image
    acc = jnp.zeros((cout, m), jnp.float32)
    for t in range(9):                             # static, unrolled tap loop
        off = (t // 3) * wp + (t % 3)              # static lane offset
        acc = acc + jnp.dot(w_ref[t], x[:, off:off + m],
                            preferred_element_type=jnp.float32)

    skip = acc + b_ref[...]                        # (Cout, M) + (Cout, 1)
    skip_ref[0] = skip

    # BN statistics over valid (strided, non-garbage) positions only.
    # TODO(synk): E[x^2]-E[x]^2 in f32 is fine at these activation scales;
    #             switch to a centered/Welford accumulation for huge ranges.
    r = jnp.maximum(skip, 0.0) * mask_ref[...]     # (Cout, M) * (1, M)
    psum_ref[...] += jnp.sum(r, axis=1, keepdims=True)
    pssq_ref[...] += jnp.sum(r * r, axis=1, keepdims=True)


# ----------------------------------------------------------------------------
# Kernel 2: out = relu(skip) * scale + shift  (BatchNorm folded to an affine,
#           broadcast per channel along the lane-dense spatial axis).
# ----------------------------------------------------------------------------
def relu_bn_kernel(skip_ref, scale_ref, shift_ref, out_ref):
    r = jnp.maximum(skip_ref[0], 0.0)              # (Cout, M)
    out_ref[0] = r * scale_ref[...] + shift_ref[...]


@functools.partial(jax.jit, static_argnames=("padding",))
def resed_downblock_forward(x_nchw, conv_w, conv_b, bn_gamma, bn_beta,
                            padding=1):
    """Returns (out, skip) in NCHW, matching ResED_DownBlock.forward."""
    p = padding
    s = padding                                    # module uses stride=padding
    n, cin, h, w = x_nchw.shape
    cout = conv_w.shape[0]

    hp, wp = h + 2 * p, w + 2 * p                  # padded spatial dims
    hof = hp - 2                                   # full stride-1 output rows
    ho = (h + 2 * p - 3) // s + 1                  # strided conv output dims
    wo = (w + 2 * p - 3) // s + 1
    m = hof * wp                                   # per-image compute width
    l = hp * wp + 2                                # +2 bleed guard for tap (2,2)

    # --- glue: pad + flatten (no im2col, no layout transpose) ----------------
    xpad = jnp.pad(x_nchw.astype(jnp.float32),
                   ((0, 0), (0, 0), (p, p), (p, p)))
    xflat = jnp.pad(xpad.reshape(n, cin, hp * wp), ((0, 0), (0, 0), (0, 2)))
    xflat = xflat.astype(jnp.bfloat16)             # (N, Cin, L)

    # conv weight (O, I, kh, kw) -> (9, O, I), tap index t = kh*3 + kw
    w_taps = jnp.transpose(conv_w.astype(jnp.float32),
                           (2, 3, 0, 1)).reshape(9, cout, cin)
    w_taps = w_taps.astype(jnp.bfloat16)
    b_col = conv_b.reshape(cout, 1).astype(jnp.float32)

    # validity mask over the flattened full-resolution grid (Hof, Wp): keeps
    # only rows/cols that are stride multiples and inside the (Ho, Wo) output.
    idx = jnp.arange(m, dtype=jnp.int32)
    row, col = idx // wp, idx % wp
    valid = ((row % s == 0) & ((row // s) < ho) &
             (col % s == 0) & ((col // s) < wo))
    mask = valid.astype(jnp.float32).reshape(1, m)

    # --- pass 1: conv + bias -> skip, plus BN partial statistics -------------
    kernel1 = functools.partial(conv3x3_stats_kernel, wp=wp)
    skip_full, psum, pssq = pl.pallas_call(
        kernel1,
        out_shape=(
            jax.ShapeDtypeStruct((n, cout, m), jnp.float32),
            jax.ShapeDtypeStruct((cout, 1), jnp.float32),
            jax.ShapeDtypeStruct((cout, 1), jnp.float32),
        ),
        grid=(n,),
        in_specs=[
            pl.BlockSpec((1, cin, l), lambda i: (i, 0, 0)),
            pl.BlockSpec((9, cout, cin), lambda i: (0, 0, 0)),
            pl.BlockSpec((cout, 1), lambda i: (0, 0)),
            pl.BlockSpec((1, m), lambda i: (0, 0)),
        ],
        out_specs=(
            pl.BlockSpec((1, cout, m), lambda i: (i, 0, 0)),
            pl.BlockSpec((cout, 1), lambda i: (0, 0)),   # resident accumulator
            pl.BlockSpec((cout, 1), lambda i: (0, 0)),   # resident accumulator
        ),
        compiler_params=pltpu.CompilerParams(
            # stats accumulate across this axis -> must be sequential
            dimension_semantics=("arbitrary",),
            vmem_limit_bytes=32 * 1024 * 1024),
    )(xflat, w_taps, b_col, mask)

    # --- tiny glue: fold BN (batch stats) into a per-channel affine ----------
    count = jnp.float32(n * ho * wo)
    mean = psum / count                            # (Cout, 1)
    var = pssq / count - mean * mean               # biased variance (BN fwd)
    eps = 1e-5
    scale = bn_gamma.reshape(cout, 1).astype(jnp.float32) / jnp.sqrt(var + eps)
    shift = bn_beta.reshape(cout, 1).astype(jnp.float32) - mean * scale

    # --- pass 2: out = relu(skip) * scale + shift ----------------------------
    out_full = pl.pallas_call(
        relu_bn_kernel,
        out_shape=jax.ShapeDtypeStruct((n, cout, m), jnp.float32),
        grid=(n,),
        in_specs=[
            pl.BlockSpec((1, cout, m), lambda i: (i, 0, 0)),
            pl.BlockSpec((cout, 1), lambda i: (0, 0)),
            pl.BlockSpec((cout, 1), lambda i: (0, 0)),
        ],
        out_specs=pl.BlockSpec((1, cout, m), lambda i: (i, 0, 0)),
        compiler_params=pltpu.CompilerParams(
            dimension_semantics=("parallel",),
            vmem_limit_bytes=32 * 1024 * 1024),
    )(skip_full, scale, shift)

    # --- glue: drop garbage columns / apply stride; result is already NCHW ---
    def crop(full):
        g = full.reshape(n, cout, hof, wp)
        return g[:, :, :(ho - 1) * s + 1:s, :(wo - 1) * s + 1:s]

    return crop(out_full), crop(skip_full)


def _reference(x, conv_w, conv_b, gamma, beta, padding, quantize_bf16=False):
    """Pure-JAX reference of the PyTorch forward (NCHW).  With
    quantize_bf16=True the conv operands get the same bf16 quantization the
    Pallas kernel feeds to the MXU (products are exact in f32, so remaining
    differences are only f32 summation order)."""
    s = padding
    if quantize_bf16:
        x = x.astype(jnp.bfloat16).astype(jnp.float32)
        conv_w = conv_w.astype(jnp.bfloat16).astype(jnp.float32)
    skip = lax.conv_general_dilated(
        x, conv_w, window_strides=(s, s),
        padding=[(padding, padding), (padding, padding)],
        dimension_numbers=("NCHW", "OIHW", "NCHW"))
    skip = skip + conv_b[None, :, None, None]
    r = jnp.maximum(skip, 0.0)
    mean = jnp.mean(r, axis=(0, 2, 3), keepdims=True)
    var = jnp.mean((r - mean) ** 2, axis=(0, 2, 3), keepdims=True)
    out = (r - mean) / jnp.sqrt(var + 1e-5)
    out = out * gamma[None, :, None, None] + beta[None, :, None, None]
    return out, skip


if __name__ == "__main__":
    # Shapes consistent with the module: batch=2, in_size=4, spatial=16x16,
    # out_size=8, padding=1 (=> stride=1), batch_norm=True.
    N, Cin, H, W = 2, 4, 16, 16
    Cout, padding = 8, 1

    key = jax.random.PRNGKey(0)
    kx, kw, kb, kg, kbe = jax.random.split(key, 5)
    x = jax.random.normal(kx, (N, Cin, H, W), dtype=jnp.float32)
    conv_w = 0.1 * jax.random.normal(kw, (Cout, Cin, 3, 3), dtype=jnp.float32)
    conv_b = 0.1 * jax.random.normal(kb, (Cout,), dtype=jnp.float32)
    bn_gamma = 1.0 + 0.1 * jax.random.normal(kg, (Cout,), dtype=jnp.float32)
    bn_beta = 0.1 * jax.random.normal(kbe, (Cout,), dtype=jnp.float32)

    out, skip = resed_downblock_forward(x, conv_w, conv_b, bn_gamma, bn_beta,
                                        padding=padding)
    jax.block_until_ready((out, skip))

    # Tight structural check: reference with the same bf16 operand quantization
    # the kernel uses for the MXU (differences are f32 summation order only).
    ref_out_q, ref_skip_q = _reference(x, conv_w, conv_b, bn_gamma, bn_beta,
                                       padding, quantize_bf16=True)
    assert out.shape == ref_out_q.shape and skip.shape == ref_skip_q.shape
    assert float(jnp.max(jnp.abs(skip - ref_skip_q))) < 1e-3
    assert float(jnp.max(jnp.abs(out - ref_out_q))) < 1e-3

    # Loose sanity check against exact f32 module semantics; the gap is purely
    # bf16 input-quantization noise of the MXU operands (structural
    # correctness is covered by the tight check above).
    ref_out, ref_skip = _reference(x, conv_w, conv_b, bn_gamma, bn_beta,
                                   padding, quantize_bf16=False)
    assert float(jnp.max(jnp.abs(skip - ref_skip))) < 5e-2
    assert float(jnp.max(jnp.abs(out - ref_out))) < 1e-1

    print("KERNEL_OK")
</pallas_src>

<mosaic_0001>
module attributes {stable_mosaic.version = 11 : i64} {
  func.func @relu_bn_kernel(%arg0: i32, %arg1: memref<1x8x288xf32, #tpu.memory_space<vmem>>, %arg2: memref<8x1xf32, #tpu.memory_space<vmem>>, %arg3: memref<8x1xf32, #tpu.memory_space<vmem>>, %arg4: memref<1x8x288xf32, #tpu.memory_space<vmem>>) attributes {dimension_semantics = [#tpu.dimension_semantics<parallel>], iteration_bounds = array<i64: 2>, scalar_prefetch = 0 : i64, scratch_operands = 0 : i64, tpu.core_type = #tpu.core_type<tc>, window_params = [{transform_indices = @transform_0, window_bounds = array<i64: 1, 8, 288>}, {pipeline_mode = #tpu.pipeline_mode<synchronous>, transform_indices = @transform_1, window_bounds = array<i64: 8, 1>}, {pipeline_mode = #tpu.pipeline_mode<synchronous>, transform_indices = @transform_2, window_bounds = array<i64: 8, 1>}, {transform_indices = @transform_3, window_bounds = array<i64: 1, 8, 288>}]} {
    %c0 = arith.constant 0 : index
    %c0_0 = arith.constant 0 : index
    %c0_1 = arith.constant 0 : index
    %0 = vector.load %arg1[%c0, %c0_0, %c0_1] : memref<1x8x288xf32, #tpu.memory_space<vmem>>, vector<1x8x288xf32>
    %1 = vector.shape_cast %0 : vector<1x8x288xf32> to vector<8x288xf32>
    %cst = arith.constant 0.000000e+00 : f32
    %2 = vector.broadcast %cst : f32 to vector<8x288xf32>
    %3 = arith.maximumf %1, %2 : vector<8x288xf32>
    %c0_2 = arith.constant 0 : index
    %c0_3 = arith.constant 0 : index
    %4 = vector.load %arg2[%c0_2, %c0_3] : memref<8x1xf32, #tpu.memory_space<vmem>>, vector<8x1xf32>
    %5 = vector.broadcast %4 : vector<8x1xf32> to vector<8x288xf32>
    %6 = arith.mulf %3, %5 : vector<8x288xf32>
    %c0_4 = arith.constant 0 : index
    %c0_5 = arith.constant 0 : index
    %7 = vector.load %arg3[%c0_4, %c0_5] : memref<8x1xf32, #tpu.memory_space<vmem>>, vector<8x1xf32>
    %8 = vector.broadcast %7 : vector<8x1xf32> to vector<8x288xf32>
    %9 = arith.addf %6, %8 : vector<8x288xf32>
    %c0_6 = arith.constant 0 : index
    %c0_7 = arith.constant 0 : index
    %c0_8 = arith.constant 0 : index
    %10 = vector.load %arg4[%c0_6, %c0_7, %c0_8] : memref<1x8x288xf32, #tpu.memory_space<vmem>>, vector<1x8x288xf32>
    %11 = vector.shape_cast %10 : vector<1x8x288xf32> to vector<8x288xf32>
    %12 = vector.shape_cast %9 : vector<8x288xf32> to vector<1x8x288xf32>
    tpu.vector_store %arg4[%c0_6, %c0_7, %c0_8], %12 {strides = array<i32>} : memref<1x8x288xf32, #tpu.memory_space<vmem>>, vector<1x8x288xf32>,
    return
  }
  func.func @transform_0(%arg0: i32) -> (i32, i32, i32) {
    %c0_i32 = arith.constant 0 : i32
    %c0_i32_0 = arith.constant 0 : i32
    %c0_i32_1 = arith.constant 0 : i32
    return %arg0, %c0_i32, %c0_i32_0 : i32, i32, i32
  }
  func.func @transform_1(%arg0: i32) -> (i32, i32) {
    %c0_i32 = arith.constant 0 : i32
    %c0_i32_0 = arith.constant 0 : i32
    %c0_i32_1 = arith.constant 0 : i32
    return %c0_i32, %c0_i32_0 : i32, i32
  }
  func.func @transform_2(%arg0: i32) -> (i32, i32) {
    %c0_i32 = arith.constant 0 : i32
    %c0_i32_0 = arith.constant 0 : i32
    %c0_i32_1 = arith.constant 0 : i32
    return %c0_i32, %c0_i32_0 : i32, i32
  }
  func.func @transform_3(%arg0: i32) -> (i32, i32, i32) {
    %c0_i32 = arith.constant 0 : i32
    %c0_i32_0 = arith.constant 0 : i32
    %c0_i32_1 = arith.constant 0 : i32
    return %arg0, %c0_i32, %c0_i32_0 : i32, i32, i32
  }
}

module attributes {stable_mosaic.version = 11 : i64} {
  func.func @conv3x3_stats_kernel(%arg0: i32, %arg1: memref<1x4x326xbf16, #tpu.memory_space<vmem>>, %arg2: memref<9x8x4xbf16, #tpu.memory_space<vmem>>, %arg3: memref<8x1xf32, #tpu.memory_space<vmem>>, %arg4: memref<1x288xf32, #tpu.memory_space<vmem>>, %arg5: memref<1x8x288xf32, #tpu.memory_space<vmem>>, %arg6: memref<8x1xf32, #tpu.memory_space<vmem>>, %arg7: memref<8x1xf32, #tpu.memory_space<vmem>>) attributes {dimension_semantics = [#tpu.dimension_semantics<arbitrary>], iteration_bounds = array<i64: 2>, scalar_prefetch = 0 : i64, scratch_operands = 0 : i64, tpu.core_type = #tpu.core_type<tc>, window_params = [{transform_indices = @transform_0, window_bounds = array<i64: 1, 4, 326>}, {pipeline_mode = #tpu.pipeline_mode<synchronous>, transform_indices = @transform_1, window_bounds = array<i64: 9, 8, 4>}, {pipeline_mode = #tpu.pipeline_mode<synchronous>, transform_indices = @transform_2, window_bounds = array<i64: 8, 1>}, {pipeline_mode = #tpu.pipeline_mode<synchronous>, transform_indices = @transform_3, window_bounds = array<i64: 1, 288>}, {transform_indices = @transform_4, window_bounds = array<i64: 1, 8, 288>}, {pipeline_mode = #tpu.pipeline_mode<synchronous>, transform_indices = @transform_5, window_bounds = array<i64: 8, 1>}, {pipeline_mode = #tpu.pipeline_mode<synchronous>, transform_indices = @transform_6, window_bounds = array<i64: 8, 1>}]} {
    %c0_i32 = arith.constant 0 : i32
    %0 = arith.cmpi eq, %arg0, %c0_i32 : i32
    %1 = arith.extui %0 : i1 to i32
    %c0_i32_0 = arith.constant 0 : i32
    %2 = arith.cmpi ne, %1, %c0_i32_0 : i32
    scf.if %2 {
      %cst_49 = arith.constant 0.000000e+00 : f32
      %73 = vector.broadcast %cst_49 : f32 to vector<8x1xf32>
      %c0_50 = arith.constant 0 : index
      %c0_51 = arith.constant 0 : index
      %74 = vector.load %arg6[%c0_50, %c0_51] : memref<8x1xf32, #tpu.memory_space<vmem>>, vector<8x1xf32>
      tpu.vector_store %arg6[%c0_50, %c0_51], %73 {strides = array<i32>} : memref<8x1xf32, #tpu.memory_space<vmem>>, vector<8x1xf32>,
      %cst_52 = arith.constant 0.000000e+00 : f32
      %75 = vector.broadcast %cst_52 : f32 to vector<8x1xf32>
      %c0_53 = arith.constant 0 : index
      %c0_54 = arith.constant 0 : index
      %76 = vector.load %arg7[%c0_53, %c0_54] : memref<8x1xf32, #tpu.memory_space<vmem>>, vector<8x1xf32>
      tpu.vector_store %arg7[%c0_53, %c0_54], %75 {strides = array<i32>} : memref<8x1xf32, #tpu.memory_space<vmem>>, vector<8x1xf32>,
    } else {
    }
    %c0 = arith.constant 0 : index
    %c0_1 = arith.constant 0 : index
    %c0_2 = arith.constant 0 : index
    %3 = vector.load %arg1[%c0, %c0_1, %c0_2] : memref<1x4x326xbf16, #tpu.memory_space<vmem>>, vector<1x4x326xbf16>
    %4 = vector.shape_cast %3 : vector<1x4x326xbf16> to vector<4x326xbf16>
    %cst = arith.constant 0.000000e+00 : f32
    %5 = vector.broadcast %cst : f32 to vector<8x288xf32>
    %c0_3 = arith.constant 0 : index
    %c0_4 = arith.constant 0 : index
    %c0_5 = arith.constant 0 : index
    %6 = vector.load %arg2[%c0_3, %c0_4, %c0_5] : memref<9x8x4xbf16, #tpu.memory_space<vmem>>, vector<1x8x4xbf16>
    %7 = vector.shape_cast %6 : vector<1x8x4xbf16> to vector<8x4xbf16>
    %8 = vector.extract_strided_slice %4 {offsets = [0, 0], sizes = [4, 288], strides = [1, 1]} : vector<4x326xbf16> to vector<4x288xbf16>
    %cst_6 = arith.constant dense<0.000000e+00> : vector<8x288xf32>
    %9 = tpu.matmul %7, %8, %cst_6 {dimension_numbers = #tpu.dot_dimension_numbers<[1], [0], [0], [1], [0, 0, 1, 1], [], []>} : vector<8x4xbf16>, vector<4x288xbf16>, vector<8x288xf32> -> vector<8x288xf32>
    %10 = arith.addf %5, %9 : vector<8x288xf32>
    %c1 = arith.constant 1 : index
    %c0_7 = arith.constant 0 : index
    %c0_8 = arith.constant 0 : index
    %11 = vector.load %arg2[%c1, %c0_7, %c0_8] : memref<9x8x4xbf16, #tpu.memory_space<vmem>>, vector<1x8x4xbf16>
    %12 = vector.shape_cast %11 : vector<1x8x4xbf16> to vector<8x4xbf16>
    %13 = vector.extract_strided_slice %4 {offsets = [0, 1], sizes = [4, 288], strides = [1, 1]} : vector<4x326xbf16> to vector<4x288xbf16>
    %cst_9 = arith.constant dense<0.000000e+00> : vector<8x288xf32>
    %14 = tpu.matmul %12, %13, %cst_9 {dimension_numbers = #tpu.dot_dimension_numbers<[1], [0], [0], [1], [0, 0, 1, 1], [], []>} : vector<8x4xbf16>, vector<4x288xbf16>, vector<8x288xf32> -> vector<8x288xf32>
    %15 = arith.addf %10, %14 : vector<8x288xf32>
    %c2 = arith.constant 2 : index
    %c0_10 = arith.constant 0 : index
    %c0_11 = arith.constant 0 : index
    %16 = vector.load %arg2[%c2, %c0_10, %c0_11] : memref<9x8x4xbf16, #tpu.memory_space<vmem>>, vector<1x8x4xbf16>
    %17 = vector.shape_cast %16 : vector<1x8x4xbf16> to vector<8x4xbf16>
    %18 = vector.extract_strided_slice %4 {offsets = [0, 2], sizes = [4, 288], strides = [1, 1]} : vector<4x326xbf16> to vector<4x288xbf16>
    %cst_12 = arith.constant dense<0.000000e+00> : vector<8x288xf32>
    %19 = tpu.matmul %17, %18, %cst_12 {dimension_numbers = #tpu.dot_dimension_numbers<[1], [0], [0], [1], [0, 0, 1, 1], [], []>} : vector<8x4xbf16>, vector<4x288xbf16>, vector<8x288xf32> -> vector<8x288xf32>
    %20 = arith.addf %15, %19 : vector<8x288xf32>
    %c3 = arith.constant 3 : index
    %c0_13 = arith.constant 0 : index
    %c0_14 = arith.constant 0 : index
    %21 = vector.load %arg2[%c3, %c0_13, %c0_14] : memref<9x8x4xbf16, #tpu.memory_space<vmem>>, vector<1x8x4xbf16>
    %22 = vector.shape_cast %21 : vector<1x8x4xbf16> to vector<8x4xbf16>
    %23 = vector.extract_strided_slice %4 {offsets = [0, 18], sizes = [4, 288], strides = [1, 1]} : vector<4x326xbf16> to vector<4x288xbf16>
    %cst_15 = arith.constant dense<0.000000e+00> : vector<8x288xf32>
    %24 = tpu.matmul %22, %23, %cst_15 {dimension_numbers = #tpu.dot_dimension_numbers<[1], [0], [0], [1], [0, 0, 1, 1], [], []>} : vector<8x4xbf16>, vector<4x288xbf16>, vector<8x288xf32> -> vector<8x288xf32>
    %25 = arith.addf %20, %24 : vector<8x288xf32>
    %c4 = arith.constant 4 : index
    %c0_16 = arith.constant 0 : index
    %c0_17 = arith.constant 0 : index
    %26 = vector.load %arg2[%c4, %c0_16, %c0_17] : memref<9x8x4xbf16, #tpu.memory_space<vmem>>, vector<1x8x4xbf16>
    %27 = vector.shape_cast %26 : vector<1x8x4xbf16> to vector<8x4xbf16>
    %28 = vector.extract_strided_slice %4 {offsets = [0, 19], sizes = [4, 288], strides = [1, 1]} : vector<4x326xbf16> to vector<4x288xbf16>
    %cst_18 = arith.constant dense<0.000000e+00> : vector<8x288xf32>
    %29 = tpu.matmul %27, %28, %cst_18 {dimension_numbers = #tpu.dot_dimension_numbers<[1], [0], [0], [1], [0, 0, 1, 1], [], []>} : vector<8x4xbf16>, vector<4x288xbf16>, vector<8x288xf32> -> vector<8x288xf32>
    %30 = arith.addf %25, %29 : vector<8x288xf32>
    %c5 = arith.constant 5 : index
    %c0_19 = arith.constant 0 : index
    %c0_20 = arith.constant 0 : index
    %31 = vector.load %arg2[%c5, %c0_19, %c0_20] : memref<9x8x4xbf16, #tpu.memory_space<vmem>>, vector<1x8x4xbf16>
    %32 = vector.shape_cast %31 : vector<1x8x4xbf16> to vector<8x4xbf16>
    %33 = vector.extract_strided_slice %4 {offsets = [0, 20], sizes = [4, 288], strides = [1, 1]} : vector<4x326xbf16> to vector<4x288xbf16>
    %cst_21 = arith.constant dense<0.000000e+00> : vector<8x288xf32>
    %34 = tpu.matmul %32, %33, %cst_21 {dimension_numbers = #tpu.dot_dimension_numbers<[1], [0], [0], [1], [0, 0, 1, 1], [], []>} : vector<8x4xbf16>, vector<4x288xbf16>, vector<8x288xf32> -> vector<8x288xf32>
    %35 = arith.addf %30, %34 : vector<8x288xf32>
    %c6 = arith.constant 6 : index
    %c0_22 = arith.constant 0 : index
    %c0_23 = arith.constant 0 : index
    %36 = vector.load %arg2[%c6, %c0_22, %c0_23] : memref<9x8x4xbf16, #tpu.memory_space<vmem>>, vector<1x8x4xbf16>
    %37 = vector.shape_cast %36 : vector<1x8x4xbf16> to vector<8x4xbf16>
    %38 = vector.extract_strided_slice %4 {offsets = [0, 36], sizes = [4, 288], strides = [1, 1]} : vector<4x326xbf16> to vector<4x288xbf16>
    %cst_24 = arith.constant dense<0.000000e+00> : vector<8x288xf32>
    %39 = tpu.matmul %37, %38, %cst_24 {dimension_numbers = #tpu.dot_dimension_numbers<[1], [0], [0], [1], [0, 0, 1, 1], [], []>} : vector<8x4xbf16>, vector<4x288xbf16>, vector<8x288xf32> -> vector<8x288xf32>
    %40 = arith.addf %35, %39 : vector<8x288xf32>
    %c7 = arith.constant 7 : index
    %c0_25 = arith.constant 0 : index
    %c0_26 = arith.constant 0 : index
    %41 = vector.load %arg2[%c7, %c0_25, %c0_26] : memref<9x8x4xbf16, #tpu.memory_space<vmem>>, vector<1x8x4xbf16>
    %42 = vector.shape_cast %41 : vector<1x8x4xbf16> to vector<8x4xbf16>
    %43 = vector.extract_strided_slice %4 {offsets = [0, 37], sizes = [4, 288], strides = [1, 1]} : vector<4x326xbf16> to vector<4x288xbf16>
    %cst_27 = arith.constant dense<0.000000e+00> : vector<8x288xf32>
    %44 = tpu.matmul %42, %43, %cst_27 {dimension_numbers = #tpu.dot_dimension_numbers<[1], [0], [0], [1], [0, 0, 1, 1], [], []>} : vector<8x4xbf16>, vector<4x288xbf16>, vector<8x288xf32> -> vector<8x288xf32>
    %45 = arith.addf %40, %44 : vector<8x288xf32>
    %c8 = arith.constant 8 : index
    %c0_28 = arith.constant 0 : index
    %c0_29 = arith.constant 0 : index
    %46 = vector.load %arg2[%c8, %c0_28, %c0_29] : memref<9x8x4xbf16, #tpu.memory_space<vmem>>, vector<1x8x4xbf16>
    %47 = vector.shape_cast %46 : vector<1x8x4xbf16> to vector<8x4xbf16>
    %48 = vector.extract_strided_slice %4 {offsets = [0, 38], sizes = [4, 288], strides = [1, 1]} : vector<4x326xbf16> to vector<4x288xbf16>
    %cst_30 = arith.constant dense<0.000000e+00> : vector<8x288xf32>
    %49 = tpu.matmul %47, %48, %cst_30 {dimension_numbers = #tpu.dot_dimension_numbers<[1], [0], [0], [1], [0, 0, 1, 1], [], []>} : vector<8x4xbf16>, vector<4x288xbf16>, vector<8x288xf32> -> vector<8x288xf32>
    %50 = arith.addf %45, %49 : vector<8x288xf32>
    %c0_31 = arith.constant 0 : index
    %c0_32 = arith.constant 0 : index
    %51 = vector.load %arg3[%c0_31, %c0_32] : memref<8x1xf32, #tpu.memory_space<vmem>>, vector<8x1xf32>
    %52 = vector.broadcast %51 : vector<8x1xf32> to vector<8x288xf32>
    %53 = arith.addf %50, %52 : vector<8x288xf32>
    %c0_33 = arith.constant 0 : index
    %c0_34 = arith.constant 0 : index
    %c0_35 = arith.constant 0 : index
    %54 = vector.load %arg5[%c0_33, %c0_34, %c0_35] : memref<1x8x288xf32, #tpu.memory_space<vmem>>, vector<1x8x288xf32>
    %55 = vector.shape_cast %54 : vector<1x8x288xf32> to vector<8x288xf32>
    %56 = vector.shape_cast %53 : vector<8x288xf32> to vector<1x8x288xf32>
    tpu.vector_store %arg5[%c0_33, %c0_34, %c0_35], %56 {strides = array<i32>} : memref<1x8x288xf32, #tpu.memory_space<vmem>>, vector<1x8x288xf32>,
    %cst_36 = arith.constant 0.000000e+00 : f32
    %57 = vector.broadcast %cst_36 : f32 to vector<8x288xf32>
    %58 = arith.maximumf %53, %57 : vector<8x288xf32>
    %c0_37 = arith.constant 0 : index
    %c0_38 = arith.constant 0 : index
    %59 = vector.load %arg4[%c0_37, %c0_38] : memref<1x288xf32, #tpu.memory_space<vmem>>, vector<1x288xf32>
    %60 = vector.broadcast %59 : vector<1x288xf32> to vector<8x288xf32>
    %61 = arith.mulf %58, %60 : vector<8x288xf32>
    %c0_39 = arith.constant 0 : index
    %c0_40 = arith.constant 0 : index
    %62 = vector.load %arg6[%c0_39, %c0_40] : memref<8x1xf32, #tpu.memory_space<vmem>>, vector<8x1xf32>
    %cst_41 = arith.constant dense<0.000000e+00> : vector<8xf32>
    %63 = vector.multi_reduction <add>, %61, %cst_41 [1] : vector<8x288xf32> to vector<8xf32>
    %64 = vector.shape_cast %63 : vector<8xf32> to vector<8x1xf32>
    %65 = arith.addf %62, %64 : vector<8x1xf32>
    %c0_42 = arith.constant 0 : index
    %c0_43 = arith.constant 0 : index
    %66 = vector.load %arg6[%c0_42, %c0_43] : memref<8x1xf32, #tpu.memory_space<vmem>>, vector<8x1xf32>
    tpu.vector_store %arg6[%c0_42, %c0_43], %65 {strides = array<i32>} : memref<8x1xf32, #tpu.memory_space<vmem>>, vector<8x1xf32>,
    %c0_44 = arith.constant 0 : index
    %c0_45 = arith.constant 0 : index
    %67 = vector.load %arg7[%c0_44, %c0_45] : memref<8x1xf32, #tpu.memory_space<vmem>>, vector<8x1xf32>
    %68 = arith.mulf %61, %61 : vector<8x288xf32>
    %cst_46 = arith.constant dense<0.000000e+00> : vector<8xf32>
    %69 = vector.multi_reduction <add>, %68, %cst_46 [1] : vector<8x288xf32> to vector<8xf32>
    %70 = vector.shape_cast %69 : vector<8xf32> to vector<8x1xf32>
    %71 = arith.addf %67, %70 : vector<8x1xf32>
    %c0_47 = arith.constant 0 : index
    %c0_48 = arith.constant 0 : index
    %72 = vector.load %arg7[%c0_47, %c0_48] : memref<8x1xf32, #tpu.memory_space<vmem>>, vector<8x1xf32>
    tpu.vector_store %arg7[%c0_47, %c0_48], %71 {strides = array<i32>} : memref<8x1xf32, #tpu.memory_space<vmem>>, vector<8x1xf32>,
    return
  }
  func.func @transform_0(%arg0: i32) -> (i32, i32, i32) {
    %c0_i32 = arith.constant 0 : i32
    %c0_i32_0 = arith.constant 0 : i32
    %c0_i32_1 = arith.constant 0 : i32
    return %arg0, %c0_i32, %c0_i32_0 : i32, i32, i32
  }
  func.func @transform_1(%arg0: i32) -> (i32, i32, i32) {
    %c0_i32 = arith.constant 0 : i32
    %c0_i32_0 = arith.constant 0 : i32
    %c0_i32_1 = arith.constant 0 : i32
    %c0_i32_2 = arith.constant 0 : i32
    return %c0_i32, %c0_i32_0, %c0_i32_1 : i32, i32, i32
  }
  func.func @transform_2(%arg0: i32) -> (i32, i32) {
    %c0_i32 = arith.constant 0 : i32
    %c0_i32_0 = arith.constant 0 : i32
    %c0_i32_1 = arith.constant 0 : i32
    return %c0_i32, %c0_i32_0 : i32, i32
  }
  func.func @transform_3(%arg0: i32) -> (i32, i32) {
    %c0_i32 = arith.constant 0 : i32
    %c0_i32_0 = arith.constant 0 : i32
    %c0_i32_1 = arith.constant 0 : i32
    return %c0_i32, %c0_i32_0 : i32, i32
  }
  func.func @transform_4(%arg0: i32) -> (i32, i32, i32) {
    %c0_i32 = arith.constant 0 : i32
    %c0_i32_0 = arith.constant 0 : i32
    %c0_i32_1 = arith.constant 0 : i32
    return %arg0, %c0_i32, %c0_i32_0 : i32, i32, i32
  }
  func.func @transform_5(%arg0: i32) -> (i32, i32) {
    %c0_i32 = arith.constant 0 : i32
    %c0_i32_0 = arith.constant 0 : i32
    %c0_i32_1 = arith.constant 0 : i32
    return %c0_i32, %c0_i32_0 : i32, i32
  }
  func.func @transform_6(%arg0: i32) -> (i32, i32) {
    %c0_i32 = arith.constant 0 : i32
    %c0_i32_0 = arith.constant 0 : i32
    %c0_i32_1 = arith.constant 0 : i32
    return %c0_i32, %c0_i32_0 : i32, i32
  }
}

</mosaic_0001>

<llo_original>
// kernel: resed_downblock_forward.3
$region0: #{resed_downblock_forward.3}
  #allocation0 [shape = 'u32[]', space=smem, size = 0x4, offset = 0x4, fixed_abs, tag = 'smem constant byte address 0x4 - core index']
  #allocation1 [shape = 'u32[144,128]{1,0:T(1,128)}', space=vmem, size = 0x12000, scoped, tag = 'internal scratch']
  %s0 = inlined_call_operand.vmem [shape: f32[2,8,288], index: 0, kind: input, shape index: {}]
  %s1 = inlined_call_operand.vmem [shape: f32[8,1], index: 1, kind: input, shape index: {}]
  %s2 = inlined_call_operand.vmem [shape: f32[8,1], index: 2, kind: input, shape index: {}]
  %s3 = inlined_call_operand.vmem [shape: f32[2,8,288], index: 3, kind: output, shape index: {}]
  %s4 = sld [smem:[#allocation0]]
  $region45: #{resed_downblock_forward.3} parent=0
    _
  %s6 = ssub.s32 1, %s4
  %s7 = scalar_select 0, %s6, %s4
  loop: start=0, step=1, limit=4
  $region2: #{resed_downblock_forward.3} parent=0 // loop_pre_header
    _
  $region3: #{resed_downblock_forward.3} parent=0 // loop_header
    %s9 = sphi 0, %s13
    %p10 = scmp.ge.s32.totalorder %s9, 4
    %s19 = sphi 0, %s21
    %s22 = sphi 0, %s19
    %s23 = sphi 0, %s22
    %s39 = sphi 0, %s23
    %s43 = sphi 0, %s43
    %s45 = sphi 0, %s43
    %s46 = sphi 0, %s45
    %s60 = sphi 0, %s46
    %s64 = sphi 0, %s64
    %s66 = sphi 0, %s64
    %s67 = sphi 0, %s66
    %s81 = sphi 0, %s67
    %s87 = sphi 0, %s89
    %s90 = sphi 0, %s87
    %s91 = sphi 0, %s90
    %s107 = sphi 0, %s91
  $region4: #{resed_downblock_forward.3} parent=0 // loop_header_branch
    %12 = sbr.rel (%p10) target = $region8
  $region5: #{resed_downblock_forward.3} parent=0 // loop_body
    %s14 = ssub.s32 %s9, 1
    %s15 = ssub.s32 %s9, 2
    %s16 = sadd.s32 %s9, 1
    %s17 = ssub.s32 %s9, %s16
    %p18 = scmp.eq.s32.totalorder %s17, 0
    %s20 = sadd.s32 %s19, 1
    %s21 = scalar_select %p18, %s19, %s20
    %p24 = pneg %p18
    %p25 = scmp.eq.s32.totalorder %s9, 1
    %p26 = por %p24, %p25
    %p27 = scmp.ne.s32.totalorder %s19, %s22
    %p28 = scmp.eq.s32.totalorder %s9, 0
    %p29 = por %p27, %p28
    %p30 = scmp.ne.s32.totalorder %s19, %s22
    %p31 = scmp.eq.s32.totalorder %s14, 1
    %p32 = por %p30, %p31
    %p33 = scmp.ne.s32.totalorder %s22, %s23
    %p34 = scmp.eq.s32.totalorder %s14, 0
    %p35 = por %p33, %p34
    %p36 = scmp.ne.s32.totalorder %s22, %s23
    %p37 = scmp.eq.s32.totalorder %s15, 1
    %p38 = por %p36, %p37
    %p40 = scmp.ne.s32.totalorder %s23, %s39
    %p41 = scmp.eq.s32.totalorder %s15, 0
    %p42 = por %p40, %p41
    %s44 = sadd.s32 %s43, 1
    %p47 = scmp.eq.s32.totalorder %s9, 1
    %p48 = scmp.ne.s32.totalorder %s43, %s45
    %p49 = scmp.eq.s32.totalorder %s9, 0
    %p50 = por %p48, %p49
    %p51 = scmp.ne.s32.totalorder %s43, %s45
    %p52 = scmp.eq.s32.totalorder %s14, 1
    %p53 = por %p51, %p52
    %p54 = scmp.ne.s32.totalorder %s45, %s46
    %p55 = scmp.eq.s32.totalorder %s14, 0
    %p56 = por %p54, %p55
    %p57 = scmp.ne.s32.totalorder %s45, %s46
    %p58 = scmp.eq.s32.totalorder %s15, 1
    %p59 = por %p57, %p58
    %p61 = scmp.ne.s32.totalorder %s46, %s60
    %p62 = scmp.eq.s32.totalorder %s15, 0
    %p63 = por %p61, %p62
    %s65 = sadd.s32 %s64, 1
    %p68 = scmp.eq.s32.totalorder %s9, 1
    %p69 = scmp.ne.s32.totalorder %s64, %s66
    %p70 = scmp.eq.s32.totalorder %s9, 0
    %p71 = por %p69, %p70
    %p72 = scmp.ne.s32.totalorder %s64, %s66
    %p73 = scmp.eq.s32.totalorder %s14, 1
    %p74 = por %p72, %p73
    %p75 = scmp.ne.s32.totalorder %s66, %s67
    %p76 = scmp.eq.s32.totalorder %s14, 0
    %p77 = por %p75, %p76
    %p78 = scmp.ne.s32.totalorder %s66, %s67
    %p79 = scmp.eq.s32.totalorder %s15, 1
    %p80 = por %p78, %p79
    %p82 = scmp.ne.s32.totalorder %s67, %s81
    %p83 = scmp.eq.s32.totalorder %s15, 0
    %p84 = por %p82, %p83
    %s85 = ssub.s32 %s9, %s16
    %p86 = scmp.eq.s32.totalorder %s85, 0
    %s88 = sadd.s32 %s87, 1
    %s89 = scalar_select %p86, %s87, %s88
    %p92 = pneg %p86
    %p93 = scmp.eq.s32.totalorder %s9, 1
    %p94 = por %p92, %p93
    %p95 = scmp.ne.s32.totalorder %s87, %s90
    %p96 = scmp.eq.s32.totalorder %s9, 0
    %p97 = por %p95, %p96
    %p98 = scmp.ne.s32.totalorder %s87, %s90
    %p99 = scmp.eq.s32.totalorder %s14, 1
    %p100 = por %p98, %p99
    %p101 = scmp.ne.s32.totalorder %s90, %s91
    %p102 = scmp.eq.s32.totalorder %s14, 0
    %p103 = por %p101, %p102
    %p104 = scmp.ne.s32.totalorder %s90, %s91
    %p105 = scmp.eq.s32.totalorder %s15, 1
    %p106 = por %p104, %p105
    %p108 = scmp.ne.s32.totalorder %s91, %s107
    %p109 = scmp.eq.s32.totalorder %s15, 0
    %p110 = por %p108, %p109
    %p111 = scmp.le.s32.totalorder 1, %s9
    %p112 = scmp.lt.s32.totalorder %s9, 3
    %p113 = pnand %p111, %p112
    %p114 = pneg %p113
    // Predicated region
    $region9: #{resed_downblock_forward.3} parent=5 // pred_check
      _
    $region10: #{resed_downblock_forward.3} parent=5 // pred_check_branch
      %116 = sbr.rel (%p113) target = $region12
    $region11: #{resed_downblock_forward.3} parent=5 // pred_region
      %s117 = ssub.s32 %s9, 1
      // Predicated region
      $region13: #{resed_downblock_forward.3} parent=11 // pred_check
        %p118 = pneg %p56
      $region14: #{resed_downblock_forward.3} parent=11 // pred_check_branch
        %120 = sbr.rel (%p118) target = $region16
      $region15: #{resed_downblock_forward.3} parent=11 // pred_region
        _
      $region16: #{resed_downblock_forward.3} parent=11 // pred_fallthru
        _
      // Predicated region
      $region17: #{resed_downblock_forward.3} parent=11 // pred_check
        %p121 = pneg %p77
      $region18: #{resed_downblock_forward.3} parent=11 // pred_check_branch
        %123 = sbr.rel (%p121) target = $region20
      $region19: #{resed_downblock_forward.3} parent=11 // pred_region
        _
      $region20: #{resed_downblock_forward.3} parent=11 // pred_fallthru
        _
    $region12: #{resed_downblock_forward.3} parent=5 // pred_fallthru
      _
    %p124 = scmp.lt.s32.totalorder %s9, 2
    // Predicated region
    $region21: #{resed_downblock_forward.3} parent=5 // pred_check
      %p125 = pneg %p124
    $region22: #{resed_downblock_forward.3} parent=5 // pred_check_branch
      %127 = sbr.rel (%p125) target = $region24
    $region23: #{resed_downblock_forward.3} parent=5 // pred_region
      // Predicated region
      $region25: #{resed_downblock_forward.3} parent=23 // pred_check
        %p128 = pneg %p29
      $region26: #{resed_downblock_forward.3} parent=23 // pred_check_branch
        %130 = sbr.rel (%p128) target = $region28
      $region27: #{resed_downblock_forward.3} parent=23 // pred_region
        %p131 = scmp.lt.s32.totalorder %s9, 1
        %s132 = scalar_select %p131, %s9, 1
        %s133 = smul.addr %s132, 3
        %s134 = smul.addr %s133, 8
        %s135 = scalar_lea.vmem %s0, %s134
      $region28: #{resed_downblock_forward.3} parent=23 // pred_fallthru
        _
    $region24: #{resed_downblock_forward.3} parent=5 // pred_fallthru
      _
    %p136 = scmp.le.s32.totalorder 1, %s9
    %p137 = scmp.lt.s32.totalorder %s9, 3
    %p138 = pnand %p136, %p137
    %p139 = pneg %p138
    // Predicated region
    $region29: #{resed_downblock_forward.3} parent=5 // pred_check
      _
    $region30: #{resed_downblock_forward.3} parent=5 // pred_check_branch
      %141 = sbr.rel (%p138) target = $region32
    $region31: #{resed_downblock_forward.3} parent=5 // pred_region
      %s142 = ssub.s32 %s9, 1
      %p143 = scmp.lt.s32.totalorder %s14, 1
      %s144 = scalar_select %p143, %s14, 1
      %s145 = smul.addr %s144, 3
      %s146 = smul.addr %s145, 8
      %s147 = scalar_lea.vmem %s0, %s146
      %p148 = pneg %p35
      %p149 = pneg %p32
      %p150 = pneg %p56
      %p151 = pneg %p53
      %p152 = pneg %p77
      %p153 = pneg %p74
      %p154 = pneg %p103
      %p155 = pneg %p100
      %p156 = scmp.lt.s32.totalorder %s14, 1
      %s157 = scalar_select %p156, %s14, 1
      %s158 = smul.addr %s157, 3
      %s159 = smul.addr %s158, 8
      %s160 = scalar_lea.vmem %s3, %s159
      %p161 = scmp.lt.s32.totalorder %s14, 1
      %s162 = scalar_select %p161, %s14, 1
      %s163 = smul.addr %s162, 3
      %s164 = smul.addr %s163, 8
      %s165 = scalar_lea.vmem %s0, %s164
      %p166 = scmp.lt.s32.totalorder %s14, 1
      %s167 = scalar_select %p166, %s14, 1
      %s168 = smul.addr %s167, 3
      %s169 = smul.addr %s168, 8
      %s170 = scalar_lea.vmem %s3, %s169
      %v171 = vld [vmem:[%s165] sm:$0xff]
      %v172 = vld [vmem:[%s165 + $0x8] sm:$0xff]
      %v173 = vld [vmem:[%s165 + $0x10] sm:$0xff]
      %v174 = vmax.f32 %v171, 0.0
      %v175 = vmax.f32 %v172, 0.0
      %v176 = vmax.f32 %v173, 0.0
      %v177 = vld [vmem:[%s1] sm:$0xff]
      %179 = vset.pattern.permute.xlu0 0
      %180 = vperm.xlu0 %179, %v177
      %v181 = vpop.permute.xlu0 %180
      %v183 = vmul.f32 %v174, %v181
      %v184 = vmul.f32 %v175, %v181
      %v185 = vmul.f32 %v176, %v181
      %v186 = vld [vmem:[%s2] sm:$0xff]
      %188 = vset.pattern.permute.xlu0 0
      %189 = vperm.xlu0 %188, %v186
      %v190 = vpop.permute.xlu0 %189
      %v192 = vadd.f32 %v183, %v190
      %v193 = vadd.f32 %v184, %v190
      %v194 = vadd.f32 %v185, %v190
      %195 = vst [vmem:[%s170] sm:$0xff] %v192
      %196 = vst [vmem:[%s170 + $0x8] sm:$0xff] %v193
      %vm197 = vcmask 261120
      %198 = vst.msk [vmem:[%s170 + $0x10] sm:$0xff] %vm197, %v194
      %p199 = scmp.lt.s32.totalorder %s14, 1
      %s200 = scalar_select %p199, %s14, 1
      %s201 = smul.addr %s200, 3
      %s202 = smul.addr %s201, 8
      %s203 = scalar_lea.vmem %s3, %s202
      // Predicated region
      $region33: #{resed_downblock_forward.3} parent=31 // pred_check
        %p204 = pneg %p100
      $region34: #{resed_downblock_forward.3} parent=31 // pred_check_branch
        %206 = sbr.rel (%p204) target = $region36
      $region35: #{resed_downblock_forward.3} parent=31 // pred_region
        _
      $region36: #{resed_downblock_forward.3} parent=31 // pred_fallthru
        _
    $region32: #{resed_downblock_forward.3} parent=5 // pred_fallthru
      _
    %p207 = scmp.le.s32.totalorder 2, %s9
    // Predicated region
    $region37: #{resed_downblock_forward.3} parent=5 // pred_check
      %p208 = pneg %p207
    $region38: #{resed_downblock_forward.3} parent=5 // pred_check_branch
      %210 = sbr.rel (%p208) target = $region40
    $region39: #{resed_downblock_forward.3} parent=5 // pred_region
      %s211 = ssub.s32 %s9, 2
      // Predicated region
      $region41: #{resed_downblock_forward.3} parent=39 // pred_check
        %p212 = pneg %p106
      $region42: #{resed_downblock_forward.3} parent=39 // pred_check_branch
        %214 = sbr.rel (%p212) target = $region44
      $region43: #{resed_downblock_forward.3} parent=39 // pred_region
        %p215 = scmp.lt.s32.totalorder %s15, 1
        %s216 = scalar_select %p215, %s15, 1
        %s217 = smul.addr %s216, 3
        %s218 = smul.addr %s217, 8
        %s219 = scalar_lea.vmem %s3, %s218
      $region44: #{resed_downblock_forward.3} parent=39 // pred_fallthru
        _
    $region40: #{resed_downblock_forward.3} parent=5 // pred_fallthru
      _
  $region6: #{resed_downblock_forward.3} parent=0 // loop_footer
    %s13 = sadd.s32 1, %s9
  $region7: #{resed_downblock_forward.3} parent=0 // loop_footer_branch
    %8 = sbr.rel target = $region3
  $region8: #{resed_downblock_forward.3} parent=0 // loop_exit
    _

// kernel: resed_downblock_forward.2
$region0: #{resed_downblock_forward.2}
  #allocation0 [shape = 'u32[]', space=smem, size = 0x4, offset = 0x4, fixed_abs, tag = 'smem constant byte address 0x4 - core index']
  #allocation1 [shape = 'u32[144,128]{1,0:T(1,128)}', space=vmem, size = 0x12000, scoped, tag = 'internal scratch']
  %s0 = inlined_call_operand.vmem [shape: bf16[2,4,326], index: 0, kind: input, shape index: {}]
  %s1 = inlined_call_operand.vmem [shape: bf16[9,8,4], index: 1, kind: input, shape index: {}]
  %s2 = inlined_call_operand.vmem [shape: f32[8,1], index: 2, kind: input, shape index: {}]
  %s3 = inlined_call_operand.vmem [shape: f32[1,288], index: 3, kind: input, shape index: {}]
  %s4 = inlined_call_operand.vmem [shape: f32[2,8,288], index: 4, kind: output, shape index: {0}]
  %s5 = inlined_call_operand.vmem [shape: f32[8,1], index: 5, kind: output, shape index: {1}]
  %s6 = inlined_call_operand.vmem [shape: f32[8,1], index: 6, kind: output, shape index: {2}]
  %7 = xla_tuple %s4, %s5, %s6
  %s8 = sld [smem:[#allocation0]]
  $region69: #{resed_downblock_forward.2} parent=0
    _
  %s10 = ssub.s32 1, %s8
  %s11 = scalar_select 0, %s10, %s8
  loop: start=0, step=1, limit=4
  $region2: #{resed_downblock_forward.2} parent=0 // loop_pre_header
    _
  $region3: #{resed_downblock_forward.2} parent=0 // loop_header
    %s13 = sphi 0, %s17
    %p14 = scmp.ge.s32.totalorder %s13, 4
    %s23 = sphi 0, %s25
    %s26 = sphi 0, %s23
    %s27 = sphi 0, %s26
    %s43 = sphi 0, %s27
    %s47 = sphi 0, %s47
    %s49 = sphi 0, %s47
    %s50 = sphi 0, %s49
    %s64 = sphi 0, %s50
    %s68 = sphi 0, %s68
    %s70 = sphi 0, %s68
    %s71 = sphi 0, %s70
    %s85 = sphi 0, %s71
    %s89 = sphi 0, %s89
    %s91 = sphi 0, %s89
    %s92 = sphi 0, %s91
    %s106 = sphi 0, %s92
    %s112 = sphi 0, %s114
    %s115 = sphi 0, %s112
    %s116 = sphi 0, %s115
    %s132 = sphi 0, %s116
    %s136 = sphi 0, %s136
    %s138 = sphi 0, %s136
    %s139 = sphi 0, %s138
    %s153 = sphi 0, %s139
    %s157 = sphi 0, %s157
    %s159 = sphi 0, %s157
    %s160 = sphi 0, %s159
    %s174 = sphi 0, %s160
  $region4: #{resed_downblock_forward.2} parent=0 // loop_header_branch
    %16 = sbr.rel (%p14) target = $region8
  $region5: #{resed_downblock_forward.2} parent=0 // loop_body
    %s18 = ssub.s32 %s13, 1
    %s19 = ssub.s32 %s13, 2
    %s20 = sadd.s32 %s13, 1
    %s21 = ssub.s32 %s13, %s20
    %p22 = scmp.eq.s32.totalorder %s21, 0
    %s24 = sadd.s32 %s23, 1
    %s25 = scalar_select %p22, %s23, %s24
    %p28 = pneg %p22
    %p29 = scmp.eq.s32.totalorder %s13, 1
    %p30 = por %p28, %p29
    %p31 = scmp.ne.s32.totalorder %s23, %s26
    %p32 = scmp.eq.s32.totalorder %s13, 0
    %p33 = por %p31, %p32
    %p34 = scmp.ne.s32.totalorder %s23, %s26
    %p35 = scmp.eq.s32.totalorder %s18, 1
    %p36 = por %p34, %p35
    %p37 = scmp.ne.s32.totalorder %s26, %s27
    %p38 = scmp.eq.s32.totalorder %s18, 0
    %p39 = por %p37, %p38
    %p40 = scmp.ne.s32.totalorder %s26, %s27
    %p41 = scmp.eq.s32.totalorder %s19, 1
    %p42 = por %p40, %p41
    %p44 = scmp.ne.s32.totalorder %s27, %s43
    %p45 = scmp.eq.s32.totalorder %s19, 0
    %p46 = por %p44, %p45
    %s48 = sadd.s32 %s47, 1
    %p51 = scmp.eq.s32.totalorder %s13, 1
    %p52 = scmp.ne.s32.totalorder %s47, %s49
    %p53 = scmp.eq.s32.totalorder %s13, 0
    %p54 = por %p52, %p53
    %p55 = scmp.ne.s32.totalorder %s47, %s49
    %p56 = scmp.eq.s32.totalorder %s18, 1
    %p57 = por %p55, %p56
    %p58 = scmp.ne.s32.totalorder %s49, %s50
    %p59 = scmp.eq.s32.totalorder %s18, 0
    %p60 = por %p58, %p59
    %p61 = scmp.ne.s32.totalorder %s49, %s50
    %p62 = scmp.eq.s32.totalorder %s19, 1
    %p63 = por %p61, %p62
    %p65 = scmp.ne.s32.totalorder %s50, %s64
    %p66 = scmp.eq.s32.totalorder %s19, 0
    %p67 = por %p65, %p66
    %s69 = sadd.s32 %s68, 1
    %p72 = scmp.eq.s32.totalorder %s13, 1
    %p73 = scmp.ne.s32.totalorder %s68, %s70
    %p74 = scmp.eq.s32.totalorder %s13, 0
    %p75 = por %p73, %p74
    %p76 = scmp.ne.s32.totalorder %s68, %s70
    %p77 = scmp.eq.s32.totalorder %s18, 1
    %p78 = por %p76, %p77
    %p79 = scmp.ne.s32.totalorder %s70, %s71
    %p80 = scmp.eq.s32.totalorder %s18, 0
    %p81 = por %p79, %p80
    %p82 = scmp.ne.s32.totalorder %s70, %s71
    %p83 = scmp.eq.s32.totalorder %s19, 1
    %p84 = por %p82, %p83
    %p86 = scmp.ne.s32.totalorder %s71, %s85
    %p87 = scmp.eq.s32.totalorder %s19, 0
    %p88 = por %p86, %p87
    %s90 = sadd.s32 %s89, 1
    %p93 = scmp.eq.s32.totalorder %s13, 1
    %p94 = scmp.ne.s32.totalorder %s89, %s91
    %p95 = scmp.eq.s32.totalorder %s13, 0
    %p96 = por %p94, %p95
    %p97 = scmp.ne.s32.totalorder %s89, %s91
    %p98 = scmp.eq.s32.totalorder %s18, 1
    %p99 = por %p97, %p98
    %p100 = scmp.ne.s32.totalorder %s91, %s92
    %p101 = scmp.eq.s32.totalorder %s18, 0
    %p102 = por %p100, %p101
    %p103 = scmp.ne.s32.totalorder %s91, %s92
    %p104 = scmp.eq.s32.totalorder %s19, 1
    %p105 = por %p103, %p104
    %p107 = scmp.ne.s32.totalorder %s92, %s106
    %p108 = scmp.eq.s32.totalorder %s19, 0
    %p109 = por %p107, %p108
    %s110 = ssub.s32 %s13, %s20
    %p111 = scmp.eq.s32.totalorder %s110, 0
    %s113 = sadd.s32 %s112, 1
    %s114 = scalar_select %p111, %s112, %s113
    %p117 = pneg %p111
    %p118 = scmp.eq.s32.totalorder %s13, 1
    %p119 = por %p117, %p118
    %p120 = scmp.ne.s32.totalorder %s112, %s115
    %p121 = scmp.eq.s32.totalorder %s13, 0
    %p122 = por %p120, %p121
    %p123 = scmp.ne.s32.totalorder %s112, %s115
    %p124 = scmp.eq.s32.totalorder %s18, 1
    %p125 = por %p123, %p124
    %p126 = scmp.ne.s32.totalorder %s115, %s116
    %p127 = scmp.eq.s32.totalorder %s18, 0
    %p128 = por %p126, %p127
    %p129 = scmp.ne.s32.totalorder %s115, %s116
    %p130 = scmp.eq.s32.totalorder %s19, 1
    %p131 = por %p129, %p130
    %p133 = scmp.ne.s32.totalorder %s116, %s132
    %p134 = scmp.eq.s32.totalorder %s19, 0
    %p135 = por %p133, %p134
    %s137 = sadd.s32 %s136, 1
    %p140 = scmp.eq.s32.totalorder %s13, 1
    %p141 = scmp.ne.s32.totalorder %s136, %s138
    %p142 = scmp.eq.s32.totalorder %s13, 0
    %p143 = por %p141, %p142
    %p144 = scmp.ne.s32.totalorder %s136, %s138
    %p145 = scmp.eq.s32.totalorder %s18, 1
    %p146 = por %p144, %p145
    %p147 = scmp.ne.s32.totalorder %s138, %s139
    %p148 = scmp.eq.s32.totalorder %s18, 0
    %p149 = por %p147, %p148
    %p150 = scmp.ne.s32.totalorder %s138, %s139
    %p151 = scmp.eq.s32.totalorder %s19, 1
    %p152 = por %p150, %p151
    %p154 = scmp.ne.s32.totalorder %s139, %s153
    %p155 = scmp.eq.s32.totalorder %s19, 0
    %p156 = por %p154, %p155
    %s158 = sadd.s32 %s157, 1
    %p161 = scmp.eq.s32.totalorder %s13, 1
    %p162 = scmp.ne.s32.totalorder %s157, %s159
    %p163 = scmp.eq.s32.totalorder %s13, 0
    %p164 = por %p162, %p163
    %p165 = scmp.ne.s32.totalorder %s157, %s159
    %p166 = scmp.eq.s32.totalorder %s18, 1
    %p167 = por %p165, %p166
    %p168 = scmp.ne.s32.totalorder %s159, %s160
    %p169 = scmp.eq.s32.totalorder %s18, 0
    %p170 = por %p168, %p169
    %p171 = scmp.ne.s32.totalorder %s159, %s160
    %p172 = scmp.eq.s32.totalorder %s19, 1
    %p173 = por %p171, %p172
    %p175 = scmp.ne.s32.totalorder %s160, %s174
    %p176 = scmp.eq.s32.totalorder %s19, 0
    %p177 = por %p175, %p176
    %p178 = scmp.le.s32.totalorder 1, %s13
    %p179 = scmp.lt.s32.totalorder %s13, 3
    %p180 = pnand %p178, %p179
    %p181 = pneg %p180
    // Predicated region
    $region9: #{resed_downblock_forward.2} parent=5 // pred_check
      _
    $region10: #{resed_downblock_forward.2} parent=5 // pred_check_branch
      %183 = sbr.rel (%p180) target = $region12
    $region11: #{resed_downblock_forward.2} parent=5 // pred_region
      %s184 = ssub.s32 %s13, 1
      // Predicated region
      $region13: #{resed_downblock_forward.2} parent=11 // pred_check
        %p185 = pneg %p60
      $region14: #{resed_downblock_forward.2} parent=11 // pred_check_branch
        %187 = sbr.rel (%p185) target = $region16
      $region15: #{resed_downblock_forward.2} parent=11 // pred_region
        _
      $region16: #{resed_downblock_forward.2} parent=11 // pred_fallthru
        _
      // Predicated region
      $region17: #{resed_downblock_forward.2} parent=11 // pred_check
        %p188 = pneg %p81
      $region18: #{resed_downblock_forward.2} parent=11 // pred_check_branch
        %190 = sbr.rel (%p188) target = $region20
      $region19: #{resed_downblock_forward.2} parent=11 // pred_region
        _
      $region20: #{resed_downblock_forward.2} parent=11 // pred_fallthru
        _
      // Predicated region
      $region21: #{resed_downblock_forward.2} parent=11 // pred_check
        %p191 = pneg %p102
      $region22: #{resed_downblock_forward.2} parent=11 // pred_check_branch
        %193 = sbr.rel (%p191) target = $region24
      $region23: #{resed_downblock_forward.2} parent=11 // pred_region
        _
      $region24: #{resed_downblock_forward.2} parent=11 // pred_fallthru
        _
    $region12: #{resed_downblock_forward.2} parent=5 // pred_fallthru
      _
    %p194 = scmp.lt.s32.totalorder %s13, 2
    // Predicated region
    $region25: #{resed_downblock_forward.2} parent=5 // pred_check
      %p195 = pneg %p194
    $region26: #{resed_downblock_forward.2} parent=5 // pred_check_branch
      %197 = sbr.rel (%p195) target = $region28
    $region27: #{resed_downblock_forward.2} parent=5 // pred_region
      // Predicated region
      $region29: #{resed_downblock_forward.2} parent=27 // pred_check
        %p198 = pneg %p33
      $region30: #{resed_downblock_forward.2} parent=27 // pred_check_branch
        %200 = sbr.rel (%p198) target = $region32
      $region31: #{resed_downblock_forward.2} parent=27 // pred_region
        %p201 = scmp.lt.s32.totalorder %s13, 1
        %s202 = scalar_select %p201, %s13, 1
        %s203 = smul.addr %s202, 3
        %s204 = smul.addr %s203, 2
        %s205 = scalar_lea.vmem %s0, %s204
      $region32: #{resed_downblock_forward.2} parent=27 // pred_fallthru
        _
    $region28: #{resed_downblock_forward.2} parent=5 // pred_fallthru
      _
    %p206 = scmp.le.s32.totalorder 1, %s13
    %p207 = scmp.lt.s32.totalorder %s13, 3
    %p208 = pnand %p206, %p207
    %p209 = pneg %p208
    // Predicated region
    $region33: #{resed_downblock_forward.2} parent=5 // pred_check
      _
    $region34: #{resed_downblock_forward.2} parent=5 // pred_check_branch
      %211 = sbr.rel (%p208) target = $region36
    $region35: #{resed_downblock_forward.2} parent=5 // pred_region
      %s212 = ssub.s32 %s13, 1
      %p213 = scmp.lt.s32.totalorder %s18, 1
      %s214 = scalar_select %p213, %s18, 1
      %s215 = smul.addr %s214, 3
      %s216 = smul.addr %s215, 2
      %s217 = scalar_lea.vmem %s0, %s216
      %p218 = pneg %p39
      %p219 = pneg %p36
      %p220 = pneg %p60
      %p221 = pneg %p57
      %p222 = pneg %p81
      %p223 = pneg %p78
      %p224 = pneg %p102
      %p225 = pneg %p99
      %p226 = pneg %p128
      %p227 = pneg %p125
      %p228 = scmp.lt.s32.totalorder %s18, 1
      %s229 = scalar_select %p228, %s18, 1
      %s230 = smul.addr %s229, 3
      %s231 = smul.addr %s230, 8
      %s232 = scalar_lea.vmem %s4, %s231
      %p233 = pneg %p149
      %p234 = pneg %p146
      %p235 = pneg %p170
      %p236 = pneg %p167
      %p237 = scmp.lt.s32.totalorder %s18, 1
      %s238 = scalar_select %p237, %s18, 1
      %s239 = smul.addr %s238, 3
      %s240 = smul.addr %s239, 2
      %s241 = scalar_lea.vmem %s0, %s240
      %p242 = scmp.lt.s32.totalorder %s18, 1
      %s243 = scalar_select %p242, %s18, 1
      %s244 = smul.addr %s243, 3
      %s245 = smul.addr %s244, 8
      %s246 = scalar_lea.vmem %s4, %s245
      %p248 = scmp.eq.s32.totalorder %s18, 0
      // Predicated region
      $region37: #{resed_downblock_forward.2} parent=35 // pred_check
        %p249 = pneg %p248
      $region38: #{resed_downblock_forward.2} parent=35 // pred_check_branch
        %251 = sbr.rel (%p249) target = $region40
      $region39: #{resed_downblock_forward.2} parent=35 // pred_region
        %vm252 = vcmask 7168
        %253 = vst.msk [vmem:[%s5] sm:$0xff] %vm252, 0.0
        %254 = vst.msk [vmem:[%s6] sm:$0xff] %vm252, 0.0
      $region40: #{resed_downblock_forward.2} parent=35 // pred_fallthru
        _
      %v255 = vld [vmem:[%s241] sm:$0x3f]
      %v256 = vld [vmem:[%s1] sm:$0xf]
      %s257 = scalar_lea.vmem %s1, 4
      %v258 = vld [vmem:[%s257] sm:$0xf]
      %v260 = vcombine.high %v255, %v255
      %v262 = vunpack.c.l.s4 1983009808
      %v263 = vunpack.c.0.s8 %v262
      %v264 = vlaneseq
      %v265 = vshrl.u32 %v264, 7
      %v266 = vsub.s32 %v263, %v265
      %v267 = vrot.slane %v255, %v266
      %v269 = vunpack.c.l.s4 1983009808
      %v270 = vunpack.c.0.s8 %v269
      %v271 = vlaneseq
      %v272 = vshrl.u32 %v271, 7
      %v273 = vsub.s32 %v270, %v272
      %v274 = vrot.slane %v260, %v273
      %v275 = vcombine.high %v267, %v267
      %276 = vrot.lane.b32.xlu0 %v267, 127
      %v277 = vpop.permute.xlu0 %276
      %278 = vrot.lane.b32.xlu0 %v275, 127
      %v279 = vpop.permute.xlu0 %278
      %280 = vrot.lane.b32.xlu0 %v274, 127
      %v281 = vpop.permute.xlu0 %280
      %vm282 = vcmask 1039360
      %v283 = vsel %vm282, %v277, %v279
      %v284 = vsel %vm282, %v279, %v281
      %vm285 = vcmask 31744
      %v287 = vsel %vm285, %v258, 0
      %vm289 = vcmask 1041408
      %v291 = vsel %vm289, %v283, 0
      %v294 = vsel %vm289, %v284, 0
      %v297 = vsel %vm289, %v281, 0
      %299 = vmatprep.subr.bf16.mxu0 %v294
      %300 = vmatpush1.bf16.msra.mxu0 %v291
      %301 = vmatprep.subr.bf16.mxu0 0
      %302 = vmatpush1.bf16.msra.mxu0 0
      %303 = vmatprep.subr.bf16.mxu0 0
      %304 = vmatpush1.bf16.msra.mxu0 0
      %305 = vmatprep.subr.bf16.mxu0 0
      %306 = vmatpush1.bf16.msra.mxu0 0
      %307 = vmatprep.subr.bf16.mxu0 0
      %308 = vmatpush1.bf16.msra.mxu0 0
      %309 = vmatprep.subr.bf16.mxu0 0
      %310 = vmatpush1.bf16.msra.mxu0 0
      %311 = vmatprep.subr.bf16.mxu0 0
      %312 = vmatpush1.bf16.msra.mxu0 0
      %313 = vmatprep.subr.bf16.mxu0 0
      %314 = vmatpush1.bf16.msra.mxu0 0
      %315 = vmatprep.subr.bf16.mxu0 0
      %316 = vmatpush1.bf16.msra.mxu0 0
      %317 = vmatprep.subr.bf16.mxu0 0
      %318 = vmatpush1.bf16.msra.mxu0 0
      %319 = vmatprep.subr.bf16.mxu0 0
      %320 = vmatpush1.bf16.msra.mxu0 0
      %321 = vmatprep.subr.bf16.mxu0 0
      %322 = vmatpush1.bf16.msra.mxu0 0
      %323 = vmatprep.subr.bf16.mxu0 0
      %324 = vmatpush1.bf16.msra.mxu0 0
      %325 = vmatprep.subr.bf16.mxu0 0
      %326 = vmatpush1.bf16.msra.mxu0 0
      %327 = vmatprep.subr.bf16.mxu0 0
      %328 = vmatpush1.bf16.msra.mxu0 0
      %329 = vmatprep.subr.bf16.mxu0 0
      %330 = vmatpush1.bf16.msra.mxu0 0
      %331 = vmatprep.mubr.bf16.mxu0 0
      %332 = vmatmul.mubr.bf16.gmra.mrb[0].mxu0 %v287
      %v333 = vpop.f32.mrb[0].mxu0
      %v334 = vadd.f32 0.0, %v333
      %v335 = vpop.f32.mrb[0].mxu0
      %v336 = vadd.f32 0.0, %v335
      %v337 = vpop.f32.mrb[0].mxu0
      %v338 = vpop.f32.mrb[0].mxu0
      %339 = vdwg.mxu0
      %340 = vmatprep.subr.bf16.mxu0 0
      %341 = vmatpush1.bf16.msra.mxu0 %v297
      %342 = vmatprep.subr.bf16.mxu0 0
      %343 = vmatpush1.bf16.msra.mxu0 0
      %344 = vmatprep.subr.bf16.mxu0 0
      %345 = vmatpush1.bf16.msra.mxu0 0
      %346 = vmatprep.subr.bf16.mxu0 0
      %347 = vmatpush1.bf16.msra.mxu0 0
      %348 = vmatprep.subr.bf16.mxu0 0
      %349 = vmatpush1.bf16.msra.mxu0 0
      %350 = vmatprep.subr.bf16.mxu0 0
      %351 = vmatpush1.bf16.msra.mxu0 0
      %352 = vmatprep.subr.bf16.mxu0 0
      %353 = vmatpush1.bf16.msra.mxu0 0
      %354 = vmatprep.subr.bf16.mxu0 0
      %355 = vmatpush1.bf16.msra.mxu0 0
      %356 = vmatprep.subr.bf16.mxu0 0
      %357 = vmatpush1.bf16.msra.mxu0 0
      %358 = vmatprep.subr.bf16.mxu0 0
      %359 = vmatpush1.bf16.msra.mxu0 0
      %360 = vmatprep.subr.bf16.mxu0 0
      %361 = vmatpush1.bf16.msra.mxu0 0
      %362 = vmatprep.subr.bf16.mxu0 0
      %363 = vmatpush1.bf16.msra.mxu0 0
      %364 = vmatprep.subr.bf16.mxu0 0
      %365 = vmatpush1.bf16.msra.mxu0 0
      %366 = vmatprep.subr.bf16.mxu0 0
      %367 = vmatpush1.bf16.msra.mxu0 0
      %368 = vmatprep.subr.bf16.mxu0 0
      %369 = vmatpush1.bf16.msra.mxu0 0
      %370 = vmatprep.subr.bf16.mxu0 0
      %371 = vmatpush1.bf16.msra.mxu0 0
      %372 = vmatprep.mubr.bf16.mxu0 0
      %373 = vmatmul.mubr.bf16.gmra.mrb[0].mxu0 %v287
      %v374 = vpop.f32.mrb[0].mxu0
      %v375 = vadd.f32 0.0, %v374
      %v376 = vpop.f32.mrb[0].mxu0
      %v377 = vpop.f32.mrb[0].mxu0
      %v378 = vpop.f32.mrb[0].mxu0
      %379 = vdwg.mxu0
      %v381 = vsel %vm285, %v256, 0
      %v384 = vsel %vm289, %v267, 0
      %v387 = vsel %vm289, %v275, 0
      %v390 = vsel %vm289, %v274, 0
      %392 = vmatprep.subr.bf16.mxu0 %v387
      %393 = vmatpush1.bf16.msra.mxu0 %v384
      %394 = vmatprep.subr.bf16.mxu0 0
      %395 = vmatpush1.bf16.msra.mxu0 0
      %396 = vmatprep.subr.bf16.mxu0 0
      %397 = vmatpush1.bf16.msra.mxu0 0
      %398 = vmatprep.subr.bf16.mxu0 0
      %399 = vmatpush1.bf16.msra.mxu0 0
      %400 = vmatprep.subr.bf16.mxu0 0
      %401 = vmatpush1.bf16.msra.mxu0 0
      %402 = vmatprep.subr.bf16.mxu0 0
      %403 = vmatpush1.bf16.msra.mxu0 0
      %404 = vmatprep.subr.bf16.mxu0 0
      %405 = vmatpush1.bf16.msra.mxu0 0
      %406 = vmatprep.subr.bf16.mxu0 0
      %407 = vmatpush1.bf16.msra.mxu0 0
      %408 = vmatprep.subr.bf16.mxu0 0
      %409 = vmatpush1.bf16.msra.mxu0 0
      %410 = vmatprep.subr.bf16.mxu0 0
      %411 = vmatpush1.bf16.msra.mxu0 0
      %412 = vmatprep.subr.bf16.mxu0 0
      %413 = vmatpush1.bf16.msra.mxu0 0
      %414 = vmatprep.subr.bf16.mxu0 0
      %415 = vmatpush1.bf16.msra.mxu0 0
      %416 = vmatprep.subr.bf16.mxu0 0
      %417 = vmatpush1.bf16.msra.mxu0 0
      %418 = vmatprep.subr.bf16.mxu0 0
      %419 = vmatpush1.bf16.msra.mxu0 0
      %420 = vmatprep.subr.bf16.mxu0 0
      %421 = vmatpush1.bf16.msra.mxu0 0
      %422 = vmatprep.subr.bf16.mxu0 0
      %423 = vmatpush1.bf16.msra.mxu0 0
      %424 = vmatprep.mubr.bf16.mxu0 0
      %425 = vmatmul.mubr.bf16.gmra.mrb[0].mxu0 %v381
      %v426 = vpop.f32.mrb[0].mxu0
      %v427 = vadd.f32 %v334, %v426
      %v428 = vpop.f32.mrb[0].mxu0
      %v429 = vadd.f32 %v336, %v428
      %v430 = vpop.f32.mrb[0].mxu0
      %v431 = vpop.f32.mrb[0].mxu0
      %432 = vdwg.mxu0
      %433 = vmatprep.subr.bf16.mxu0 0
      %434 = vmatpush1.bf16.msra.mxu0 %v390
      %435 = vmatprep.subr.bf16.mxu0 0
      %436 = vmatpush1.bf16.msra.mxu0 0
      %437 = vmatprep.subr.bf16.mxu0 0
      %438 = vmatpush1.bf16.msra.mxu0 0
      %439 = vmatprep.subr.bf16.mxu0 0
      %440 = vmatpush1.bf16.msra.mxu0 0
      %441 = vmatprep.subr.bf16.mxu0 0
      %442 = vmatpush1.bf16.msra.mxu0 0
      %443 = vmatprep.subr.bf16.mxu0 0
      %444 = vmatpush1.bf16.msra.mxu0 0
      %445 = vmatprep.subr.bf16.mxu0 0
      %446 = vmatpush1.bf16.msra.mxu0 0
      %447 = vmatprep.subr.bf16.mxu0 0
      %448 = vmatpush1.bf16.msra.mxu0 0
      %449 = vmatprep.subr.bf16.mxu0 0
      %450 = vmatpush1.bf16.msra.mxu0 0
      %451 = vmatprep.subr.bf16.mxu0 0
      %452 = vmatpush1.bf16.msra.mxu0 0
      %453 = vmatprep.subr.bf16.mxu0 0
      %454 = vmatpush1.bf16.msra.mxu0 0
      %455 = vmatprep.subr.bf16.mxu0 0
      %456 = vmatpush1.bf16.msra.mxu0 0
      %457 = vmatprep.subr.bf16.mxu0 0
      %458 = vmatpush1.bf16.msra.mxu0 0
      %459 = vmatprep.subr.bf16.mxu0 0
      %460 = vmatpush1.bf16.msra.mxu0 0
      %461 = vmatprep.subr.bf16.mxu0 0
      %462 = vmatpush1.bf16.msra.mxu0 0
      %463 = vmatprep.subr.bf16.mxu0 0
      %464 = vmatpush1.bf16.msra.mxu0 0
      %465 = vmatprep.mubr.bf16.mxu0 0
      %466 = vmatmul.mubr.bf16.gmra.mrb[0].mxu0 %v381
      %v467 = vpop.f32.mrb[0].mxu0
      %v468 = vadd.f32 %v375, %v467
      %v469 = vpop.f32.mrb[0].mxu0
      %v470 = vpop.f32.mrb[0].mxu0
      %v471 = vpop.f32.mrb[0].mxu0
      %472 = vdwg.mxu0
      %s473 = scalar_lea.vmem %s1, 8
      %v474 = vld [vmem:[%s473] sm:$0xf]
      %475 = vrot.lane.b32.xlu0 %v267, 126
      %v476 = vpop.permute.xlu0 %475
      %477 = vrot.lane.b32.xlu0 %v275, 126
      %v478 = vpop.permute.xlu0 %477
      %479 = vrot.lane.b32.xlu0 %v274, 126
      %v480 = vpop.permute.xlu0 %479
      %vm481 = vcmask 1031168
      %v482 = vsel %vm481, %v476, %v478
      %v483 = vsel %vm481, %v478, %v480
      %v485 = vsel %vm285, %v474, 0
      %v488 = vsel %vm289, %v482, 0
      %v491 = vsel %vm289, %v483, 0
      %v494 = vsel %vm289, %v480, 0
      %496 = vmatprep.subr.bf16.mxu0 %v491
      %497 = vmatpush1.bf16.msra.mxu0 %v488
      %498 = vmatprep.subr.bf16.mxu0 0
      %499 = vmatpush1.bf16.msra.mxu0 0
      %500 = vmatprep.subr.bf16.mxu0 0
      %501 = vmatpush1.bf16.msra.mxu0 0
      %502 = vmatprep.subr.bf16.mxu0 0
      %503 = vmatpush1.bf16.msra.mxu0 0
      %504 = vmatprep.subr.bf16.mxu0 0
      %505 = vmatpush1.bf16.msra.mxu0 0
      %506 = vmatprep.subr.bf16.mxu0 0
      %507 = vmatpush1.bf16.msra.mxu0 0
      %508 = vmatprep.subr.bf16.mxu0 0
      %509 = vmatpush1.bf16.msra.mxu0 0
      %510 = vmatprep.subr.bf16.mxu0 0
      %511 = vmatpush1.bf16.msra.mxu0 0
      %512 = vmatprep.subr.bf16.mxu0 0
      %513 = vmatpush1.bf16.msra.mxu0 0
      %514 = vmatprep.subr.bf16.mxu0 0
      %515 = vmatpush1.bf16.msra.mxu0 0
      %516 = vmatprep.subr.bf16.mxu0 0
      %517 = vmatpush1.bf16.msra.mxu0 0
      %518 = vmatprep.subr.bf16.mxu0 0
      %519 = vmatpush1.bf16.msra.mxu0 0
      %520 = vmatprep.subr.bf16.mxu0 0
      %521 = vmatpush1.bf16.msra.mxu0 0
      %522 = vmatprep.subr.bf16.mxu0 0
      %523 = vmatpush1.bf16.msra.mxu0 0
      %524 = vmatprep.subr.bf16.mxu0 0
      %525 = vmatpush1.bf16.msra.mxu0 0
      %526 = vmatprep.subr.bf16.mxu0 0
      %527 = vmatpush1.bf16.msra.mxu0 0
      %528 = vmatprep.mubr.bf16.mxu0 0
      %529 = vmatmul.mubr.bf16.gmra.mrb[0].mxu0 %v485
      %v530 = vpop.f32.mrb[0].mxu0
      %v531 = vadd.f32 0.0, %v530
      %v532 = vpop.f32.mrb[0].mxu0
      %v533 = vadd.f32 0.0, %v532
      %v534 = vpop.f32.mrb[0].mxu0
      %v535 = vpop.f32.mrb[0].mxu0
      %536 = vdwg.mxu0
      %537 = vmatprep.subr.bf16.mxu0 0
      %538 = vmatpush1.bf16.msra.mxu0 %v494
      %539 = vmatprep.subr.bf16.mxu0 0
      %540 = vmatpush1.bf16.msra.mxu0 0
      %541 = vmatprep.subr.bf16.mxu0 0
      %542 = vmatpush1.bf16.msra.mxu0 0
      %543 = vmatprep.subr.bf16.mxu0 0
      %544 = vmatpush1.bf16.msra.mxu0 0
      %545 = vmatprep.subr.bf16.mxu0 0
      %546 = vmatpush1.bf16.msra.mxu0 0
      %547 = vmatprep.subr.bf16.mxu0 0
      %548 = vmatpush1.bf16.msra.mxu0 0
      %549 = vmatprep.subr.bf16.mxu0 0
      %550 = vmatpush1.bf16.msra.mxu0 0
      %551 = vmatprep.subr.bf16.mxu0 0
      %552 = vmatpush1.bf16.msra.mxu0 0
      %553 = vmatprep.subr.bf16.mxu0 0
      %554 = vmatpush1.bf16.msra.mxu0 0
      %555 = vmatprep.subr.bf16.mxu0 0
      %556 = vmatpush1.bf16.msra.mxu0 0
      %557 = vmatprep.subr.bf16.mxu0 0
      %558 = vmatpush1.bf16.msra.mxu0 0
      %559 = vmatprep.subr.bf16.mxu0 0
      %560 = vmatpush1.bf16.msra.mxu0 0
      %561 = vmatprep.subr.bf16.mxu0 0
      %562 = vmatpush1.bf16.msra.mxu0 0
      %563 = vmatprep.subr.bf16.mxu0 0
      %564 = vmatpush1.bf16.msra.mxu0 0
      %565 = vmatprep.subr.bf16.mxu0 0
      %566 = vmatpush1.bf16.msra.mxu0 0
      %567 = vmatprep.subr.bf16.mxu0 0
      %568 = vmatpush1.bf16.msra.mxu0 0
      %569 = vmatprep.mubr.bf16.mxu0 0
      %570 = vmatmul.mubr.bf16.gmra.mrb[0].mxu0 %v485
      %v571 = vpop.f32.mrb[0].mxu0
      %v572 = vadd.f32 0.0, %v571
      %v573 = vpop.f32.mrb[0].mxu0
      %v574 = vpop.f32.mrb[0].mxu0
      %v575 = vpop.f32.mrb[0].mxu0
      %576 = vdwg.mxu0
      %v577 = vadd.f32 %v427, %v531
      %v578 = vadd.f32 %v429, %v533
      %v579 = vadd.f32 %v468, %v572
      %s580 = scalar_lea.vmem %s1, 12
      %v581 = vld [vmem:[%s580] sm:$0xf]
      %582 = vrot.lane.b32.xlu0 %v267, 110
      %v583 = vpop.permute.xlu0 %582
      %584 = vrot.lane.b32.xlu0 %v275, 110
      %v585 = vpop.permute.xlu0 %584
      %586 = vrot.lane.b32.xlu0 %v274, 110
      %v587 = vpop.permute.xlu0 %586
      %vm588 = vcmask 900096
      %v589 = vsel %vm588, %v583, %v585
      %v590 = vsel %vm588, %v585, %v587
      %v592 = vsel %vm285, %v581, 0
      %v595 = vsel %vm289, %v589, 0
      %v598 = vsel %vm289, %v590, 0
      %v601 = vsel %vm289, %v587, 0
      %603 = vmatprep.subr.bf16.mxu0 %v598
      %604 = vmatpush1.bf16.msra.mxu0 %v595
      %605 = vmatprep.subr.bf16.mxu0 0
      %606 = vmatpush1.bf16.msra.mxu0 0
      %607 = vmatprep.subr.bf16.mxu0 0
      %608 = vmatpush1.bf16.msra.mxu0 0
      %609 = vmatprep.subr.bf16.mxu0 0
      %610 = vmatpush1.bf16.msra.mxu0 0
      %611 = vmatprep.subr.bf16.mxu0 0
      %612 = vmatpush1.bf16.msra.mxu0 0
      %613 = vmatprep.subr.bf16.mxu0 0
      %614 = vmatpush1.bf16.msra.mxu0 0
      %615 = vmatprep.subr.bf16.mxu0 0
      %616 = vmatpush1.bf16.msra.mxu0 0
      %617 = vmatprep.subr.bf16.mxu0 0
      %618 = vmatpush1.bf16.msra.mxu0 0
      %619 = vmatprep.subr.bf16.mxu0 0
      %620 = vmatpush1.bf16.msra.mxu0 0
      %621 = vmatprep.subr.bf16.mxu0 0
      %622 = vmatpush1.bf16.msra.mxu0 0
      %623 = vmatprep.subr.bf16.mxu0 0
      %624 = vmatpush1.bf16.msra.mxu0 0
      %625 = vmatprep.subr.bf16.mxu0 0
      %626 = vmatpush1.bf16.msra.mxu0 0
      %627 = vmatprep.subr.bf16.mxu0 0
      %628 = vmatpush1.bf16.msra.mxu0 0
      %629 = vmatprep.subr.bf16.mxu0 0
      %630 = vmatpush1.bf16.msra.mxu0 0
      %631 = vmatprep.subr.bf16.mxu0 0
      %632 = vmatpush1.bf16.msra.mxu0 0
      %633 = vmatprep.subr.bf16.mxu0 0
      %634 = vmatpush1.bf16.msra.mxu0 0
      %635 = vmatprep.mubr.bf16.mxu0 0
      %636 = vmatmul.mubr.bf16.gmra.mrb[0].mxu0 %v592
      %v637 = vpop.f32.mrb[0].mxu0
      %v638 = vadd.f32 0.0, %v637
      %v639 = vpop.f32.mrb[0].mxu0
      %v640 = vadd.f32 0.0, %v639
      %v641 = vpop.f32.mrb[0].mxu0
      %v642 = vpop.f32.mrb[0].mxu0
      %643 = vdwg.mxu0
      %644 = vmatprep.subr.bf16.mxu0 0
      %645 = vmatpush1.bf16.msra.mxu0 %v601
      %646 = vmatprep.subr.bf16.mxu0 0
      %647 = vmatpush1.bf16.msra.mxu0 0
      %648 = vmatprep.subr.bf16.mxu0 0
      %649 = vmatpush1.bf16.msra.mxu0 0
      %650 = vmatprep.subr.bf16.mxu0 0
      %651 = vmatpush1.bf16.msra.mxu0 0
      %652 = vmatprep.subr.bf16.mxu0 0
      %653 = vmatpush1.bf16.msra.mxu0 0
      %654 = vmatprep.subr.bf16.mxu0 0
      %655 = vmatpush1.bf16.msra.mxu0 0
      %656 = vmatprep.subr.bf16.mxu0 0
      %657 = vmatpush1.bf16.msra.mxu0 0
      %658 = vmatprep.subr.bf16.mxu0 0
      %659 = vmatpush1.bf16.msra.mxu0 0
      %660 = vmatprep.subr.bf16.mxu0 0
      %661 = vmatpush1.bf16.msra.mxu0 0
      %662 = vmatprep.subr.bf16.mxu0 0
      %663 = vmatpush1.bf16.msra.mxu0 0
      %664 = vmatprep.subr.bf16.mxu0 0
      %665 = vmatpush1.bf16.msra.mxu0 0
      %666 = vmatprep.subr.bf16.mxu0 0
      %667 = vmatpush1.bf16.msra.mxu0 0
      %668 = vmatprep.subr.bf16.mxu0 0
      %669 = vmatpush1.bf16.msra.mxu0 0
      %670 = vmatprep.subr.bf16.mxu0 0
      %671 = vmatpush1.bf16.msra.mxu0 0
      %672 = vmatprep.subr.bf16.mxu0 0
      %673 = vmatpush1.bf16.msra.mxu0 0
      %674 = vmatprep.subr.bf16.mxu0 0
      %675 = vmatpush1.bf16.msra.mxu0 0
      %676 = vmatprep.mubr.bf16.mxu0 0
      %677 = vmatmul.mubr.bf16.gmra.mrb[0].mxu0 %v592
      %v678 = vpop.f32.mrb[0].mxu0
      %v679 = vadd.f32 0.0, %v678
      %v680 = vpop.f32.mrb[0].mxu0
      %v681 = vpop.f32.mrb[0].mxu0
      %v682 = vpop.f32.mrb[0].mxu0
      %683 = vdwg.mxu0
      %v684 = vadd.f32 %v577, %v638
      %v685 = vadd.f32 %v578, %v640
      %v686 = vadd.f32 %v579, %v679
      %s687 = scalar_lea.vmem %s1, 16
      %v688 = vld [vmem:[%s687] sm:$0xf]
      %689 = vrot.lane.b32.xlu0 %v267, 109
      %v690 = vpop.permute.xlu0 %689
      %691 = vrot.lane.b32.xlu0 %v275, 109
      %v692 = vpop.permute.xlu0 %691
      %693 = vrot.lane.b32.xlu0 %v274, 109
      %v694 = vpop.permute.xlu0 %693
      %vm695 = vcmask 891904
      %v696 = vsel %vm695, %v690, %v692
      %v697 = vsel %vm695, %v692, %v694
      %v699 = vsel %vm285, %v688, 0
      %v702 = vsel %vm289, %v696, 0
      %v705 = vsel %vm289, %v697, 0
      %v708 = vsel %vm289, %v694, 0
      %710 = vmatprep.subr.bf16.mxu0 %v705
      %711 = vmatpush1.bf16.msra.mxu0 %v702
      %712 = vmatprep.subr.bf16.mxu0 0
      %713 = vmatpush1.bf16.msra.mxu0 0
      %714 = vmatprep.subr.bf16.mxu0 0
      %715 = vmatpush1.bf16.msra.mxu0 0
      %716 = vmatprep.subr.bf16.mxu0 0
      %717 = vmatpush1.bf16.msra.mxu0 0
      %718 = vmatprep.subr.bf16.mxu0 0
      %719 = vmatpush1.bf16.msra.mxu0 0
      %720 = vmatprep.subr.bf16.mxu0 0
      %721 = vmatpush1.bf16.msra.mxu0 0
      %722 = vmatprep.subr.bf16.mxu0 0
      %723 = vmatpush1.bf16.msra.mxu0 0
      %724 = vmatprep.subr.bf16.mxu0 0
      %725 = vmatpush1.bf16.msra.mxu0 0
      %726 = vmatprep.subr.bf16.mxu0 0
      %727 = vmatpush1.bf16.msra.mxu0 0
      %728 = vmatprep.subr.bf16.mxu0 0
      %729 = vmatpush1.bf16.msra.mxu0 0
      %730 = vmatprep.subr.bf16.mxu0 0
      %731 = vmatpush1.bf16.msra.mxu0 0
      %732 = vmatprep.subr.bf16.mxu0 0
      %733 = vmatpush1.bf16.msra.mxu0 0
      %734 = vmatprep.subr.bf16.mxu0 0
      %735 = vmatpush1.bf16.msra.mxu0 0
      %736 = vmatprep.subr.bf16.mxu0 0
      %737 = vmatpush1.bf16.msra.mxu0 0
      %738 = vmatprep.subr.bf16.mxu0 0
      %739 = vmatpush1.bf16.msra.mxu0 0
      %740 = vmatprep.subr.bf16.mxu0 0
      %741 = vmatpush1.bf16.msra.mxu0 0
      %742 = vmatprep.mubr.bf16.mxu0 0
      %743 = vmatmul.mubr.bf16.gmra.mrb[0].mxu0 %v699
      %v744 = vpop.f32.mrb[0].mxu0
      %v745 = vadd.f32 0.0, %v744
      %v746 = vpop.f32.mrb[0].mxu0
      %v747 = vadd.f32 0.0, %v746
      %v748 = vpop.f32.mrb[0].mxu0
      %v749 = vpop.f32.mrb[0].mxu0
      %750 = vdwg.mxu0
      %751 = vmatprep.subr.bf16.mxu0 0
      %752 = vmatpush1.bf16.msra.mxu0 %v708
      %753 = vmatprep.subr.bf16.mxu0 0
      %754 = vmatpush1.bf16.msra.mxu0 0
      %755 = vmatprep.subr.bf16.mxu0 0
      %756 = vmatpush1.bf16.msra.mxu0 0
      %757 = vmatprep.subr.bf16.mxu0 0
      %758 = vmatpush1.bf16.msra.mxu0 0
      %759 = vmatprep.subr.bf16.mxu0 0
      %760 = vmatpush1.bf16.msra.mxu0 0
      %761 = vmatprep.subr.bf16.mxu0 0
      %762 = vmatpush1.bf16.msra.mxu0 0
      %763 = vmatprep.subr.bf16.mxu0 0
      %764 = vmatpush1.bf16.msra.mxu0 0
      %765 = vmatprep.subr.bf16.mxu0 0
      %766 = vmatpush1.bf16.msra.mxu0 0
      %767 = vmatprep.subr.bf16.mxu0 0
      %768 = vmatpush1.bf16.msra.mxu0 0
      %769 = vmatprep.subr.bf16.mxu0 0
      %770 = vmatpush1.bf16.msra.mxu0 0
      %771 = vmatprep.subr.bf16.mxu0 0
      %772 = vmatpush1.bf16.msra.mxu0 0
      %773 = vmatprep.subr.bf16.mxu0 0
      %774 = vmatpush1.bf16.msra.mxu0 0
      %775 = vmatprep.subr.bf16.mxu0 0
      %776 = vmatpush1.bf16.msra.mxu0 0
      %777 = vmatprep.subr.bf16.mxu0 0
      %778 = vmatpush1.bf16.msra.mxu0 0
      %779 = vmatprep.subr.bf16.mxu0 0
      %780 = vmatpush1.bf16.msra.mxu0 0
      %781 = vmatprep.subr.bf16.mxu0 0
      %782 = vmatpush1.bf16.msra.mxu0 0
      %783 = vmatprep.mubr.bf16.mxu0 0
      %784 = vmatmul.mubr.bf16.gmra.mrb[0].mxu0 %v699
      %v785 = vpop.f32.mrb[0].mxu0
      %v786 = vadd.f32 0.0, %v785
      %v787 = vpop.f32.mrb[0].mxu0
      %v788 = vpop.f32.mrb[0].mxu0
      %v789 = vpop.f32.mrb[0].mxu0
      %790 = vdwg.mxu0
      %v791 = vadd.f32 %v684, %v745
      %v792 = vadd.f32 %v685, %v747
      %v793 = vadd.f32 %v686, %v786
      %s794 = scalar_lea.vmem %s1, 20
      %v795 = vld [vmem:[%s794] sm:$0xf]
      %796 = vrot.lane.b32.xlu0 %v267, 108
      %v797 = vpop.permute.xlu0 %796
      %798 = vrot.lane.b32.xlu0 %v275, 108
      %v799 = vpop.permute.xlu0 %798
      %800 = vrot.lane.b32.xlu0 %v274, 108
      %v801 = vpop.permute.xlu0 %800
      %vm802 = vcmask 883712
      %v803 = vsel %vm802, %v797, %v799
      %v804 = vsel %vm802, %v799, %v801
      %v806 = vsel %vm285, %v795, 0
      %v809 = vsel %vm289, %v803, 0
      %v812 = vsel %vm289, %v804, 0
      %v815 = vsel %vm289, %v801, 0
      %817 = vmatprep.subr.bf16.mxu0 %v812
      %818 = vmatpush1.bf16.msra.mxu0 %v809
      %819 = vmatprep.subr.bf16.mxu0 0
      %820 = vmatpush1.bf16.msra.mxu0 0
      %821 = vmatprep.subr.bf16.mxu0 0
      %822 = vmatpush1.bf16.msra.mxu0 0
      %823 = vmatprep.subr.bf16.mxu0 0
      %824 = vmatpush1.bf16.msra.mxu0 0
      %825 = vmatprep.subr.bf16.mxu0 0
      %826 = vmatpush1.bf16.msra.mxu0 0
      %827 = vmatprep.subr.bf16.mxu0 0
      %828 = vmatpush1.bf16.msra.mxu0 0
      %829 = vmatprep.subr.bf16.mxu0 0
      %830 = vmatpush1.bf16.msra.mxu0 0
      %831 = vmatprep.subr.bf16.mxu0 0
      %832 = vmatpush1.bf16.msra.mxu0 0
      %833 = vmatprep.subr.bf16.mxu0 0
      %834 = vmatpush1.bf16.msra.mxu0 0
      %835 = vmatprep.subr.bf16.mxu0 0
      %836 = vmatpush1.bf16.msra.mxu0 0
      %837 = vmatprep.subr.bf16.mxu0 0
      %838 = vmatpush1.bf16.msra.mxu0 0
      %839 = vmatprep.subr.bf16.mxu0 0
      %840 = vmatpush1.bf16.msra.mxu0 0
      %841 = vmatprep.subr.bf16.mxu0 0
      %842 = vmatpush1.bf16.msra.mxu0 0
      %843 = vmatprep.subr.bf16.mxu0 0
      %844 = vmatpush1.bf16.msra.mxu0 0
      %845 = vmatprep.subr.bf16.mxu0 0
      %846 = vmatpush1.bf16.msra.mxu0 0
      %847 = vmatprep.subr.bf16.mxu0 0
      %848 = vmatpush1.bf16.msra.mxu0 0
      %849 = vmatprep.mubr.bf16.mxu0 0
      %850 = vmatmul.mubr.bf16.gmra.mrb[0].mxu0 %v806
      %v851 = vpop.f32.mrb[0].mxu0
      %v852 = vadd.f32 0.0, %v851
      %v853 = vpop.f32.mrb[0].mxu0
      %v854 = vadd.f32 0.0, %v853
      %v855 = vpop.f32.mrb[0].mxu0
      %v856 = vpop.f32.mrb[0].mxu0
      %857 = vdwg.mxu0
      %858 = vmatprep.subr.bf16.mxu0 0
      %859 = vmatpush1.bf16.msra.mxu0 %v815
      %860 = vmatprep.subr.bf16.mxu0 0
      %861 = vmatpush1.bf16.msra.mxu0 0
      %862 = vmatprep.subr.bf16.mxu0 0
      %863 = vmatpush1.bf16.msra.mxu0 0
      %864 = vmatprep.subr.bf16.mxu0 0
      %865 = vmatpush1.bf16.msra.mxu0 0
      %866 = vmatprep.subr.bf16.mxu0 0
      %867 = vmatpush1.bf16.msra.mxu0 0
      %868 = vmatprep.subr.bf16.mxu0 0
      %869 = vmatpush1.bf16.msra.mxu0 0
      %870 = vmatprep.subr.bf16.mxu0 0
      %871 = vmatpush1.bf16.msra.mxu0 0
      %872 = vmatprep.subr.bf16.mxu0 0
      %873 = vmatpush1.bf16.msra.mxu0 0
      %874 = vmatprep.subr.bf16.mxu0 0
      %875 = vmatpush1.bf16.msra.mxu0 0
      %876 = vmatprep.subr.bf16.mxu0 0
      %877 = vmatpush1.bf16.msra.mxu0 0
      %878 = vmatprep.subr.bf16.mxu0 0
      %879 = vmatpush1.bf16.msra.mxu0 0
      %880 = vmatprep.subr.bf16.mxu0 0
      %881 = vmatpush1.bf16.msra.mxu0 0
      %882 = vmatprep.subr.bf16.mxu0 0
      %883 = vmatpush1.bf16.msra.mxu0 0
      %884 = vmatprep.subr.bf16.mxu0 0
      %885 = vmatpush1.bf16.msra.mxu0 0
      %886 = vmatprep.subr.bf16.mxu0 0
      %887 = vmatpush1.bf16.msra.mxu0 0
      %888 = vmatprep.subr.bf16.mxu0 0
      %889 = vmatpush1.bf16.msra.mxu0 0
      %890 = vmatprep.mubr.bf16.mxu0 0
      %891 = vmatmul.mubr.bf16.gmra.mrb[0].mxu0 %v806
      %v892 = vpop.f32.mrb[0].mxu0
      %v893 = vadd.f32 0.0, %v892
      %v894 = vpop.f32.mrb[0].mxu0
      %v895 = vpop.f32.mrb[0].mxu0
      %v896 = vpop.f32.mrb[0].mxu0
      %897 = vdwg.mxu0
      %v898 = vadd.f32 %v791, %v852
      %v899 = vadd.f32 %v792, %v854
      %v900 = vadd.f32 %v793, %v893
      %s901 = scalar_lea.vmem %s1, 24
      %v902 = vld [vmem:[%s901] sm:$0xf]
      %903 = vrot.lane.b32.xlu0 %v267, 92
      %v904 = vpop.permute.xlu0 %903
      %905 = vrot.lane.b32.xlu0 %v275, 92
      %v906 = vpop.permute.xlu0 %905
      %907 = vrot.lane.b32.xlu0 %v274, 92
      %v908 = vpop.permute.xlu0 %907
      %vm909 = vcmask 752640
      %v910 = vsel %vm909, %v904, %v906
      %v911 = vsel %vm909, %v906, %v908
      %v913 = vsel %vm285, %v902, 0
      %v916 = vsel %vm289, %v910, 0
      %v919 = vsel %vm289, %v911, 0
      %v922 = vsel %vm289, %v908, 0
      %924 = vmatprep.subr.bf16.mxu0 %v919
      %925 = vmatpush1.bf16.msra.mxu0 %v916
      %926 = vmatprep.subr.bf16.mxu0 0
      %927 = vmatpush1.bf16.msra.mxu0 0
      %928 = vmatprep.subr.bf16.mxu0 0
      %929 = vmatpush1.bf16.msra.mxu0 0
      %930 = vmatprep.subr.bf16.mxu0 0
      %931 = vmatpush1.bf16.msra.mxu0 0
      %932 = vmatprep.subr.bf16.mxu0 0
      %933 = vmatpush1.bf16.msra.mxu0 0
      %934 = vmatprep.subr.bf16.mxu0 0
      %935 = vmatpush1.bf16.msra.mxu0 0
      %936 = vmatprep.subr.bf16.mxu0 0
      %937 = vmatpush1.bf16.msra.mxu0 0
      %938 = vmatprep.subr.bf16.mxu0 0
      %939 = vmatpush1.bf16.msra.mxu0 0
      %940 = vmatprep.subr.bf16.mxu0 0
      %941 = vmatpush1.bf16.msra.mxu0 0
      %942 = vmatprep.subr.bf16.mxu0 0
      %943 = vmatpush1.bf16.msra.mxu0 0
      %944 = vmatprep.subr.bf16.mxu0 0
      %945 = vmatpush1.bf16.msra.mxu0 0
      %946 = vmatprep.subr.bf16.mxu0 0
      %947 = vmatpush1.bf16.msra.mxu0 0
      %948 = vmatprep.subr.bf16.mxu0 0
      %949 = vmatpush1.bf16.msra.mxu0 0
      %950 = vmatprep.subr.bf16.mxu0 0
      %951 = vmatpush1.bf16.msra.mxu0 0
      %952 = vmatprep.subr.bf16.mxu0 0
      %953 = vmatpush1.bf16.msra.mxu0 0
      %954 = vmatprep.subr.bf16.mxu0 0
      %955 = vmatpush1.bf16.msra.mxu0 0
      %956 = vmatprep.mubr.bf16.mxu0 0
      %957 = vmatmul.mubr.bf16.gmra.mrb[0].mxu0 %v913
      %v958 = vpop.f32.mrb[0].mxu0
      %v959 = vadd.f32 0.0, %v958
      %v960 = vpop.f32.mrb[0].mxu0
      %v961 = vadd.f32 0.0, %v960
      %v962 = vpop.f32.mrb[0].mxu0
      %v963 = vpop.f32.mrb[0].mxu0
      %964 = vdwg.mxu0
      %965 = vmatprep.subr.bf16.mxu0 0
      %966 = vmatpush1.bf16.msra.mxu0 %v922
      %967 = vmatprep.subr.bf16.mxu0 0
      %968 = vmatpush1.bf16.msra.mxu0 0
      %969 = vmatprep.subr.bf16.mxu0 0
      %970 = vmatpush1.bf16.msra.mxu0 0
      %971 = vmatprep.subr.bf16.mxu0 0
      %972 = vmatpush1.bf16.msra.mxu0 0
      %973 = vmatprep.subr.bf16.mxu0 0
      %974 = vmatpush1.bf16.msra.mxu0 0
      %975 = vmatprep.subr.bf16.mxu0 0
      %976 = vmatpush1.bf16.msra.mxu0 0
      %977 = vmatprep.subr.bf16.mxu0 0
      %978 = vmatpush1.bf16.msra.mxu0 0
      %979 = vmatprep.subr.bf16.mxu0 0
      %980 = vmatpush1.bf16.msra.mxu0 0
      %981 = vmatprep.subr.bf16.mxu0 0
      %982 = vmatpush1.bf16.msra.mxu0 0
      %983 = vmatprep.subr.bf16.mxu0 0
      %984 = vmatpush1.bf16.msra.mxu0 0
      %985 = vmatprep.subr.bf16.mxu0 0
      %986 = vmatpush1.bf16.msra.mxu0 0
      %987 = vmatprep.subr.bf16.mxu0 0
      %988 = vmatpush1.bf16.msra.mxu0 0
      %989 = vmatprep.subr.bf16.mxu0 0
      %990 = vmatpush1.bf16.msra.mxu0 0
      %991 = vmatprep.subr.bf16.mxu0 0
      %992 = vmatpush1.bf16.msra.mxu0 0
      %993 = vmatprep.subr.bf16.mxu0 0
      %994 = vmatpush1.bf16.msra.mxu0 0
      %995 = vmatprep.subr.bf16.mxu0 0
      %996 = vmatpush1.bf16.msra.mxu0 0
      %997 = vmatprep.mubr.bf16.mxu0 0
      %998 = vmatmul.mubr.bf16.gmra.mrb[0].mxu0 %v913
      %v999 = vpop.f32.mrb[0].mxu0
      %v1000 = vadd.f32 0.0, %v999
      %v1001 = vpop.f32.mrb[0].mxu0
      %v1002 = vpop.f32.mrb[0].mxu0
      %v1003 = vpop.f32.mrb[0].mxu0
      %1004 = vdwg.mxu0
      %v1005 = vadd.f32 %v898, %v959
      %v1006 = vadd.f32 %v899, %v961
      %v1007 = vadd.f32 %v900, %v1000
      %s1008 = scalar_lea.vmem %s1, 28
      %v1009 = vld [vmem:[%s1008] sm:$0xf]
      %1010 = vrot.lane.b32.xlu0 %v267, 91
      %v1011 = vpop.permute.xlu0 %1010
      %1012 = vrot.lane.b32.xlu0 %v275, 91
      %v1013 = vpop.permute.xlu0 %1012
      %1014 = vrot.lane.b32.xlu0 %v274, 91
      %v1015 = vpop.permute.xlu0 %1014
      %vm1016 = vcmask 744448
      %v1017 = vsel %vm1016, %v1011, %v1013
      %v1018 = vsel %vm1016, %v1013, %v1015
      %v1020 = vsel %vm285, %v1009, 0
      %v1023 = vsel %vm289, %v1017, 0
      %v1026 = vsel %vm289, %v1018, 0
      %v1029 = vsel %vm289, %v1015, 0
      %1031 = vmatprep.subr.bf16.mxu0 %v1026
      %1032 = vmatpush1.bf16.msra.mxu0 %v1023
      %1033 = vmatprep.subr.bf16.mxu0 0
      %1034 = vmatpush1.bf16.msra.mxu0 0
      %1035 = vmatprep.subr.bf16.mxu0 0
      %1036 = vmatpush1.bf16.msra.mxu0 0
      %1037 = vmatprep.subr.bf16.mxu0 0
      %1038 = vmatpush1.bf16.msra.mxu0 0
      %1039 = vmatprep.subr.bf16.mxu0 0
      %1040 = vmatpush1.bf16.msra.mxu0 0
      %1041 = vmatprep.subr.bf16.mxu0 0
      %1042 = vmatpush1.bf16.msra.mxu0 0
      %1043 = vmatprep.subr.bf16.mxu0 0
      %1044 = vmatpush1.bf16.msra.mxu0 0
      %1045 = vmatprep.subr.bf16.mxu0 0
      %1046 = vmatpush1.bf16.msra.mxu0 0
      %1047 = vmatprep.subr.bf16.mxu0 0
      %1048 = vmatpush1.bf16.msra.mxu0 0
      %1049 = vmatprep.subr.bf16.mxu0 0
      %1050 = vmatpush1.bf16.msra.mxu0 0
      %1051 = vmatprep.subr.bf16.mxu0 0
      %1052 = vmatpush1.bf16.msra.mxu0 0
      %1053 = vmatprep.subr.bf16.mxu0 0
      %1054 = vmatpush1.bf16.msra.mxu0 0
      %1055 = vmatprep.subr.bf16.mxu0 0
      %1056 = vmatpush1.bf16.msra.mxu0 0
      %1057 = vmatprep.subr.bf16.mxu0 0
      %1058 = vmatpush1.bf16.msra.mxu0 0
      %1059 = vmatprep.subr.bf16.mxu0 0
      %1060 = vmatpush1.bf16.msra.mxu0 0
      %1061 = vmatprep.subr.bf16.mxu0 0
      %1062 = vmatpush1.bf16.msra.mxu0 0
      %1063 = vmatprep.mubr.bf16.mxu0 0
      %1064 = vmatmul.mubr.bf16.gmra.mrb[0].mxu0 %v1020
      %v1065 = vpop.f32.mrb[0].mxu0
      %v1066 = vadd.f32 0.0, %v1065
      %v1067 = vpop.f32.mrb[0].mxu0
      %v1068 = vadd.f32 0.0, %v1067
      %v1069 = vpop.f32.mrb[0].mxu0
      %v1070 = vpop.f32.mrb[0].mxu0
      %1071 = vdwg.mxu0
      %1072 = vmatprep.subr.bf16.mxu0 0
      %1073 = vmatpush1.bf16.msra.mxu0 %v1029
      %1074 = vmatprep.subr.bf16.mxu0 0
      %1075 = vmatpush1.bf16.msra.mxu0 0
      %1076 = vmatprep.subr.bf16.mxu0 0
      %1077 = vmatpush1.bf16.msra.mxu0 0
      %1078 = vmatprep.subr.bf16.mxu0 0
      %1079 = vmatpush1.bf16.msra.mxu0 0
      %1080 = vmatprep.subr.bf16.mxu0 0
      %1081 = vmatpush1.bf16.msra.mxu0 0
      %1082 = vmatprep.subr.bf16.mxu0 0
      %1083 = vmatpush1.bf16.msra.mxu0 0
      %1084 = vmatprep.subr.bf16.mxu0 0
      %1085 = vmatpush1.bf16.msra.mxu0 0
      %1086 = vmatprep.subr.bf16.mxu0 0
      %1087 = vmatpush1.bf16.msra.mxu0 0
      %1088 = vmatprep.subr.bf16.mxu0 0
      %1089 = vmatpush1.bf16.msra.mxu0 0
      %1090 = vmatprep.subr.bf16.mxu0 0
      %1091 = vmatpush1.bf16.msra.mxu0 0
      %1092 = vmatprep.subr.bf16.mxu0 0
      %1093 = vmatpush1.bf16.msra.mxu0 0
      %1094 = vmatprep.subr.bf16.mxu0 0
      %1095 = vmatpush1.bf16.msra.mxu0 0
      %1096 = vmatprep.subr.bf16.mxu0 0
      %1097 = vmatpush1.bf16.msra.mxu0 0
      %1098 = vmatprep.subr.bf16.mxu0 0
      %1099 = vmatpush1.bf16.msra.mxu0 0
      %1100 = vmatprep.subr.bf16.mxu0 0
      %1101 = vmatpush1.bf16.msra.mxu0 0
      %1102 = vmatprep.subr.bf16.mxu0 0
      %1103 = vmatpush1.bf16.msra.mxu0 0
      %1104 = vmatprep.mubr.bf16.mxu0 0
      %1105 = vmatmul.mubr.bf16.gmra.mrb[0].mxu0 %v1020
      %v1106 = vpop.f32.mrb[0].mxu0
      %v1107 = vadd.f32 0.0, %v1106
      %v1108 = vpop.f32.mrb[0].mxu0
      %v1109 = vpop.f32.mrb[0].mxu0
      %v1110 = vpop.f32.mrb[0].mxu0
      %1111 = vdwg.mxu0
      %v1112 = vadd.f32 %v1005, %v1066
      %v1113 = vadd.f32 %v1006, %v1068
      %v1114 = vadd.f32 %v1007, %v1107
      %s1115 = scalar_lea.vmem %s1, 32
      %v1116 = vld [vmem:[%s1115] sm:$0xf]
      %1117 = vrot.lane.b32.xlu0 %v267, 90
      %v1118 = vpop.permute.xlu0 %1117
      %1119 = vrot.lane.b32.xlu0 %v275, 90
      %v1120 = vpop.permute.xlu0 %1119
      %1121 = vrot.lane.b32.xlu0 %v274, 90
      %v1122 = vpop.permute.xlu0 %1121
      %vm1123 = vcmask 736256
      %v1124 = vsel %vm1123, %v1118, %v1120
      %v1125 = vsel %vm1123, %v1120, %v1122
      %v1127 = vsel %vm285, %v1116, 0
      %v1130 = vsel %vm289, %v1124, 0
      %v1133 = vsel %vm289, %v1125, 0
      %v1136 = vsel %vm289, %v1122, 0
      %1138 = vmatprep.subr.bf16.mxu0 %v1133
      %1139 = vmatpush1.bf16.msra.mxu0 %v1130
      %1140 = vmatprep.subr.bf16.mxu0 0
      %1141 = vmatpush1.bf16.msra.mxu0 0
      %1142 = vmatprep.subr.bf16.mxu0 0
      %1143 = vmatpush1.bf16.msra.mxu0 0
      %1144 = vmatprep.subr.bf16.mxu0 0
      %1145 = vmatpush1.bf16.msra.mxu0 0
      %1146 = vmatprep.subr.bf16.mxu0 0
      %1147 = vmatpush1.bf16.msra.mxu0 0
      %1148 = vmatprep.subr.bf16.mxu0 0
      %1149 = vmatpush1.bf16.msra.mxu0 0
      %1150 = vmatprep.subr.bf16.mxu0 0
      %1151 = vmatpush1.bf16.msra.mxu0 0
      %1152 = vmatprep.subr.bf16.mxu0 0
      %1153 = vmatpush1.bf16.msra.mxu0 0
      %1154 = vmatprep.subr.bf16.mxu0 0
      %1155 = vmatpush1.bf16.msra.mxu0 0
      %1156 = vmatprep.subr.bf16.mxu0 0
      %1157 = vmatpush1.bf16.msra.mxu0 0
      %1158 = vmatprep.subr.bf16.mxu0 0
      %1159 = vmatpush1.bf16.msra.mxu0 0
      %1160 = vmatprep.subr.bf16.mxu0 0
      %1161 = vmatpush1.bf16.msra.mxu0 0
      %1162 = vmatprep.subr.bf16.mxu0 0
      %1163 = vmatpush1.bf16.msra.mxu0 0
      %1164 = vmatprep.subr.bf16.mxu0 0
      %1165 = vmatpush1.bf16.msra.mxu0 0
      %1166 = vmatprep.subr.bf16.mxu0 0
      %1167 = vmatpush1.bf16.msra.mxu0 0
      %1168 = vmatprep.subr.bf16.mxu0 0
      %1169 = vmatpush1.bf16.msra.mxu0 0
      %1170 = vmatprep.mubr.bf16.mxu0 0
      %1171 = vmatmul.mubr.bf16.gmra.mrb[0].mxu0 %v1127
      %v1172 = vpop.f32.mrb[0].mxu0
      %v1173 = vadd.f32 0.0, %v1172
      %v1174 = vpop.f32.mrb[0].mxu0
      %v1175 = vadd.f32 0.0, %v1174
      %v1176 = vpop.f32.mrb[0].mxu0
      %v1177 = vpop.f32.mrb[0].mxu0
      %1178 = vdwg.mxu0
      %1179 = vmatprep.subr.bf16.mxu0 0
      %1180 = vmatpush1.bf16.msra.mxu0 %v1136
      %1181 = vmatprep.subr.bf16.mxu0 0
      %1182 = vmatpush1.bf16.msra.mxu0 0
      %1183 = vmatprep.subr.bf16.mxu0 0
      %1184 = vmatpush1.bf16.msra.mxu0 0
      %1185 = vmatprep.subr.bf16.mxu0 0
      %1186 = vmatpush1.bf16.msra.mxu0 0
      %1187 = vmatprep.subr.bf16.mxu0 0
      %1188 = vmatpush1.bf16.msra.mxu0 0
      %1189 = vmatprep.subr.bf16.mxu0 0
      %1190 = vmatpush1.bf16.msra.mxu0 0
      %1191 = vmatprep.subr.bf16.mxu0 0
      %1192 = vmatpush1.bf16.msra.mxu0 0
      %1193 = vmatprep.subr.bf16.mxu0 0
      %1194 = vmatpush1.bf16.msra.mxu0 0
      %1195 = vmatprep.subr.bf16.mxu0 0
      %1196 = vmatpush1.bf16.msra.mxu0 0
      %1197 = vmatprep.subr.bf16.mxu0 0
      %1198 = vmatpush1.bf16.msra.mxu0 0
      %1199 = vmatprep.subr.bf16.mxu0 0
      %1200 = vmatpush1.bf16.msra.mxu0 0
      %1201 = vmatprep.subr.bf16.mxu0 0
      %1202 = vmatpush1.bf16.msra.mxu0 0
      %1203 = vmatprep.subr.bf16.mxu0 0
      %1204 = vmatpush1.bf16.msra.mxu0 0
      %1205 = vmatprep.subr.bf16.mxu0 0
      %1206 = vmatpush1.bf16.msra.mxu0 0
      %1207 = vmatprep.subr.bf16.mxu0 0
      %1208 = vmatpush1.bf16.msra.mxu0 0
      %1209 = vmatprep.subr.bf16.mxu0 0
      %1210 = vmatpush1.bf16.msra.mxu0 0
      %1211 = vmatprep.mubr.bf16.mxu0 0
      %1212 = vmatmul.mubr.bf16.gmra.mrb[0].mxu0 %v1127
      %v1213 = vpop.f32.mrb[0].mxu0
      %v1214 = vadd.f32 0.0, %v1213
      %v1215 = vpop.f32.mrb[0].mxu0
      %v1216 = vpop.f32.mrb[0].mxu0
      %v1217 = vpop.f32.mrb[0].mxu0
      %1218 = vdwg.mxu0
      %v1219 = vadd.f32 %v1112, %v1173
      %v1220 = vadd.f32 %v1113, %v1175
      %v1221 = vadd.f32 %v1114, %v1214
      %v1222 = vld [vmem:[%s2] sm:$0xff]
      %1224 = vset.pattern.permute.xlu0 0
      %1225 = vperm.xlu0 %1224, %v1222
      %v1226 = vpop.permute.xlu0 %1225
      %v1228 = vadd.f32 %v1219, %v1226
      %v1229 = vadd.f32 %v1220, %v1226
      %v1230 = vadd.f32 %v1221, %v1226
      %1231 = vst [vmem:[%s246] sm:$0xff] %v1228
      %1232 = vst [vmem:[%s246 + $0x8] sm:$0xff] %v1229
      %vm1233 = vcmask 261120
      %1234 = vst.msk [vmem:[%s246 + $0x10] sm:$0xff] %vm1233, %v1230
      %v1235 = vmax.f32 %v1228, 0.0
      %v1236 = vmax.f32 %v1229, 0.0
      %v1237 = vmax.f32 %v1230, 0.0
      %v1238 = vld [vmem:[%s3] sm:$0x7]
      %v1240 = vlaneseq
      %v1241 = vshrl.u32 %v1240, 7
      %v1242 = vsub.s32 0, %v1241
      %v1243 = vrot.slane %v1238, %v1242
      %v1244 = vlaneseq
      %v1245 = vshrl.u32 %v1244, 7
      %v1246 = vsub.s32 1, %v1245
      %v1247 = vrot.slane %v1238, %v1246
      %v1248 = vlaneseq
      %v1249 = vshrl.u32 %v1248, 7
      %v1250 = vsub.s32 2, %v1249
      %v1251 = vrot.slane %v1238, %v1250
      %v1255 = vmul.f32 %v1235, %v1243
      %v1256 = vmul.f32 %v1236, %v1247
      %v1257 = vmul.f32 %v1237, %v1251
      %v1258 = vld [vmem:[%s5] sm:$0xff]
      %v1259 = vadd.f32 %v1255, %v1256
      %v1260 = vsel %vm1233, %v1257, 0.0
      %v1261 = vadd.f32 %v1259, %v1260
      %1262 = vadd.xlane.f32.xlu0 %v1261
      %v1263 = vpop.xlane.xlu0 %1262
      %v1264 = vadd.f32 %v1258, %v1263
      %vm1265 = vcmask 7168
      %1266 = vst.msk [vmem:[%s5] sm:$0xff] %vm1265, %v1264
      %v1267 = vld [vmem:[%s6] sm:$0xff]
      %v1268 = vmul.f32 %v1255, %v1255
      %v1269 = vmul.f32 %v1256, %v1256
      %v1270 = vmul.f32 %v1257, %v1257
      %v1271 = vadd.f32 %v1268, %v1269
      %v1272 = vsel %vm1233, %v1270, 0.0
      %v1273 = vadd.f32 %v1271, %v1272
      %1274 = vadd.xlane.f32.xlu0 %v1273
      %v1275 = vpop.xlane.xlu0 %1274
      %v1276 = vadd.f32 %v1267, %v1275
      %1277 = vst.msk [vmem:[%s6] sm:$0xff] %vm1265, %v1276
      %p1278 = scmp.lt.s32.totalorder %s18, 1
      %s1279 = scalar_select %p1278, %s18, 1
      %s1280 = smul.addr %s1279, 3
      %s1281 = smul.addr %s1280, 8
      %s1282 = scalar_lea.vmem %s4, %s1281
      // Predicated region
      $region41: #{resed_downblock_forward.2} parent=35 // pred_check
        %p1283 = pneg %p125
      $region42: #{resed_downblock_forward.2} parent=35 // pred_check_branch
        %1285 = sbr.rel (%p1283) target = $region44
      $region43: #{resed_downblock_forward.2} parent=35 // pred_region
        _
      $region44: #{resed_downblock_forward.2} parent=35 // pred_fallthru
        _
      // Predicated region
      $region45: #{resed_downblock_forward.2} parent=35 // pred_check
        %p1286 = pneg %p146
      $region46: #{resed_downblock_forward.2} parent=35 // pred_check_branch
        %1288 = sbr.rel (%p1286) target = $region48
      $region47: #{resed_downblock_forward.2} parent=35 // pred_region
        _
      $region48: #{resed_downblock_forward.2} parent=35 // pred_fallthru
        _
      // Predicated region
      $region49: #{resed_downblock_forward.2} parent=35 // pred_check
        %p1289 = pneg %p167
      $region50: #{resed_downblock_forward.2} parent=35 // pred_check_branch
        %1291 = sbr.rel (%p1289) target = $region52
      $region51: #{resed_downblock_forward.2} parent=35 // pred_region
        _
      $region52: #{resed_downblock_forward.2} parent=35 // pred_fallthru
        _
      // Predicated region
      $region53: #{resed_downblock_forward.2} parent=35 // pred_check
        %p1292 = pneg %p146
      $region54: #{resed_downblock_forward.2} parent=35 // pred_check_branch
        %1294 = sbr.rel (%p1292) target = $region56
      $region55: #{resed_downblock_forward.2} parent=35 // pred_region
        _
      $region56: #{resed_downblock_forward.2} parent=35 // pred_fallthru
        _
      // Predicated region
      $region57: #{resed_downblock_forward.2} parent=35 // pred_check
        %p1295 = pneg %p167
      $region58: #{resed_downblock_forward.2} parent=35 // pred_check_branch
        %1297 = sbr.rel (%p1295) target = $region60
      $region59: #{resed_downblock_forward.2} parent=35 // pred_region
        _
      $region60: #{resed_downblock_forward.2} parent=35 // pred_fallthru
        _
    $region36: #{resed_downblock_forward.2} parent=5 // pred_fallthru
      _
    %p1298 = scmp.le.s32.totalorder 2, %s13
    // Predicated region
    $region61: #{resed_downblock_forward.2} parent=5 // pred_check
      %p1299 = pneg %p1298
    $region62: #{resed_downblock_forward.2} parent=5 // pred_check_branch
      %1301 = sbr.rel (%p1299) target = $region64
    $region63: #{resed_downblock_forward.2} parent=5 // pred_region
      %s1302 = ssub.s32 %s13, 2
      // Predicated region
      $region65: #{resed_downblock_forward.2} parent=63 // pred_check
        %p1303 = pneg %p131
      $region66: #{resed_downblock_forward.2} parent=63 // pred_check_branch
        %1305 = sbr.rel (%p1303) target = $region68
      $region67: #{resed_downblock_forward.2} parent=63 // pred_region
        %p1306 = scmp.lt.s32.totalorder %s19, 1
        %s1307 = scalar_select %p1306, %s19, 1
        %s1308 = smul.addr %s1307, 3
        %s1309 = smul.addr %s1308, 8
        %s1310 = scalar_lea.vmem %s4, %s1309
      $region68: #{resed_downblock_forward.2} parent=63 // pred_fallthru
        _
    $region64: #{resed_downblock_forward.2} parent=5 // pred_fallthru
      _
  $region6: #{resed_downblock_forward.2} parent=0 // loop_footer
    %s17 = sadd.s32 1, %s13
  $region7: #{resed_downblock_forward.2} parent=0 // loop_footer_branch
    %12 = sbr.rel target = $region3
  $region8: #{resed_downblock_forward.2} parent=0 // loop_exit
    _

</llo_original>
